<compile_context>
chip_gen: v7x
topology: tpu7x:2x2x1
jax: 0.10.0
libtpu: 0.0.40
codegen_flags: <defaults>
</compile_context>

<pallas_src>
import jax
import jax.numpy as jnp
from jax.experimental import pallas as pl
from jax.experimental.pallas import tpu as pltpu

LN_EPS = 1e-5  # nn.LayerNorm default


# -----------------------------------------------------------------------------
# Kernel: one (TILE_M, D) row tile x one (TILE_H,) hidden-dim block.
# -----------------------------------------------------------------------------
def feedforward_kernel(x_ref, ln_w_ref, ln_b_ref, w1_ref, b1_ref, w2_ref,
                       b2_ref, o_ref, xn_ref, acc_ref):
    h_idx = pl.program_id(1)

    # First H block for this row tile: LayerNorm once, cache bf16 result,
    # zero the fp32 output accumulator.
    @pl.when(h_idx == 0)
    def _():
        x = x_ref[...].astype(jnp.float32)                      # (TILE_M, D)
        mu = jnp.mean(x, axis=-1, keepdims=True)
        var = jnp.mean((x - mu) ** 2, axis=-1, keepdims=True)
        xn = (x - mu) * jax.lax.rsqrt(var + LN_EPS)
        xn = xn * ln_w_ref[...] + ln_b_ref[...]
        xn_ref[...] = xn.astype(xn_ref.dtype)
        acc_ref[...] = jnp.zeros_like(acc_ref)

    # Linear 1 (this H block): bf16 operands on the MXU, fp32 accumulation.
    h = jnp.dot(xn_ref[...], w1_ref[...],
                preferred_element_type=jnp.float32) + b1_ref[...]

    # tanh GELU -> EUP slot (exact erf would be a long VPU polynomial).
    h = jax.nn.gelu(h, approximate=True)

    # Linear 2 partial sum for this H block, accumulated in fp32 VMEM scratch.
    acc_ref[...] += jnp.dot(h.astype(w2_ref.dtype), w2_ref[...],
                            preferred_element_type=jnp.float32)

    # Last H block: add output bias and store (lane-dense, full D).
    @pl.when(h_idx == pl.num_programs(1) - 1)
    def _():
        o_ref[...] = (acc_ref[...] + b2_ref[...]).astype(o_ref.dtype)


# -----------------------------------------------------------------------------
# Wrapper
# -----------------------------------------------------------------------------
def _round_up(v, m):
    return (v + m - 1) // m * m


def _choose_tile_m(m, d, itemsize, target_bytes=1 << 20, max_tile=2048):
    """Row-tile size: ~1 MiB activation tiles, multiples of 256, >=2 steps."""
    t = target_bytes // max(d * itemsize, 1)
    t = max(256, min(max_tile, (t // 256) * 256))
    # Shrink for small inputs so the pipeline still gets >=2 grid steps.
    t = min(t, max(8, _round_up(-(-m // 2), 8)))
    return t


def _choose_tile_h(h, max_tile=512):
    """Hidden-dim block: must evenly divide H (ragged H blocks would feed
    garbage columns into the accumulation)."""
    for t in (512, 384, 256, 128):
        if t <= max_tile and h % t == 0:
            return t
    return h  # no clean 128-multiple divisor -> keep H resident


def feedforward(x, params, *, tile_m=None, tile_h=None,
                vmem_limit_bytes=32 * 1024 * 1024):
    """Apply FeedForward to x of shape (..., D)."""
    orig_shape = x.shape
    D = orig_shape[-1]
    H = params["w1"].shape[1]

    # Flatten leading dims into a row axis; NO padding -- Pallas masks the
    # ragged final row tile.
    x2 = x.reshape(-1, D)
    m = x2.shape[0]

    if tile_m is None:
        tile_m = _choose_tile_m(m, D, x2.dtype.itemsize)
    if tile_h is None:
        tile_h = _choose_tile_h(H)

    grid = (pl.cdiv(m, tile_m), pl.cdiv(H, tile_h))

    ln_w, ln_b = params["ln_w"], params["ln_b"]
    w1, b1, w2, b2 = params["w1"], params["b1"], params["w2"], params["b2"]
    weights = (ln_w, ln_b, w1, b1, w2, b2)
    weight_bytes = sum(int(w.size) * w.dtype.itemsize for w in weights)
    cost = pl.CostEstimate(
        flops=2 * 2 * m * D * H,                         # two matmuls
        transcendentals=m * H,                           # tanh inside GELU
        bytes_accessed=2 * int(x2.size) * x2.dtype.itemsize + weight_bytes,
    )

    out = pl.pallas_call(
        feedforward_kernel,
        out_shape=jax.ShapeDtypeStruct((m, D), x.dtype),
        grid_spec=pltpu.PrefetchScalarGridSpec(
            num_scalar_prefetch=0,
            grid=grid,
            in_specs=[
                pl.BlockSpec((tile_m, D), lambda i, h: (i, 0)),      # x
                pl.BlockSpec((1, D), lambda i, h: (0, 0)),           # ln_w
                pl.BlockSpec((1, D), lambda i, h: (0, 0)),           # ln_b
                pl.BlockSpec((D, tile_h), lambda i, h: (0, h)),      # w1
                pl.BlockSpec((1, tile_h), lambda i, h: (0, h)),      # b1
                pl.BlockSpec((tile_h, D), lambda i, h: (h, 0)),      # w2
                pl.BlockSpec((1, D), lambda i, h: (0, 0)),           # b2
            ],
            out_specs=pl.BlockSpec((tile_m, D), lambda i, h: (i, 0)),
            scratch_shapes=[
                pltpu.VMEM((tile_m, D), jnp.bfloat16),   # cached LayerNorm(x)
                pltpu.VMEM((tile_m, D), jnp.float32),    # output accumulator
            ],
        ),
        compiler_params=pltpu.CompilerParams(
            dimension_semantics=("parallel", "arbitrary"),
            vmem_limit_bytes=vmem_limit_bytes,
        ),
        cost_estimate=cost,
    )(x2, *weights)

    return out.reshape(orig_shape)


# -----------------------------------------------------------------------------
# Deterministic synthetic parameters (PyTorch Linear weights stored transposed
# as (in, out); matmul weights kept in bf16, LN params and biases in fp32).
# -----------------------------------------------------------------------------
def init_params(key, dim, hidden_dim):
    k1, k2, k3, k4 = jax.random.split(key, 4)
    return {
        "ln_w": jnp.ones((1, dim), jnp.float32),
        "ln_b": jnp.zeros((1, dim), jnp.float32),
        "w1": (0.05 * jax.random.normal(k1, (dim, hidden_dim), jnp.float32)
               ).astype(jnp.bfloat16),
        "b1": 0.05 * jax.random.normal(k2, (1, hidden_dim), jnp.float32),
        "w2": (0.05 * jax.random.normal(k3, (hidden_dim, dim), jnp.float32)
               ).astype(jnp.bfloat16),
        "b2": 0.05 * jax.random.normal(k4, (1, dim), jnp.float32),
    }


# -----------------------------------------------------------------------------
# Pure-JAX reference mirroring the PyTorch forward (fp32 math, exact-erf GELU).
# -----------------------------------------------------------------------------
def reference_forward(x, p):
    xf = x.astype(jnp.float32)
    mu = xf.mean(-1, keepdims=True)
    var = ((xf - mu) ** 2).mean(-1, keepdims=True)
    xn = (xf - mu) / jnp.sqrt(var + LN_EPS) * p["ln_w"][0] + p["ln_b"][0]
    h = xn @ p["w1"].astype(jnp.float32) + p["b1"][0]
    h = jax.nn.gelu(h, approximate=False)
    out = h @ p["w2"].astype(jnp.float32) + p["b2"][0]
    return out.astype(x.dtype)


# -----------------------------------------------------------------------------
if __name__ == "__main__":
    B, N, dim, hidden_dim = 2, 256, 128, 256   # D=128 -> lane-dense output

    key = jax.random.PRNGKey(0)
    kx, kp = jax.random.split(key)
    x = jax.random.normal(kx, (B, N, dim), jnp.float32)
    params = init_params(kp, dim, hidden_dim)

    out = feedforward(x, params)               # grid = (2 row tiles, 1 H block)
    out = jax.block_until_ready(out)

    ref = reference_forward(x, params)
    assert out.shape == (B, N, dim)
    err = float(jnp.max(jnp.abs(out - ref)))
    # bf16 matmul operands + tanh GELU vs the fp32 exact-erf reference.
    assert err < 2e-2, err

    print("KERNEL_OK")
</pallas_src>

<mosaic_0001>
module attributes {stable_mosaic.version = 11 : i64} {
  func.func @feedforward_kernel(%arg0: i32, %arg1: i32, %arg2: memref<256x128xf32, #tpu.memory_space<vmem>>, %arg3: memref<1x128xf32, #tpu.memory_space<vmem>>, %arg4: memref<1x128xf32, #tpu.memory_space<vmem>>, %arg5: memref<128x256xbf16, #tpu.memory_space<vmem>>, %arg6: memref<1x256xf32, #tpu.memory_space<vmem>>, %arg7: memref<256x128xbf16, #tpu.memory_space<vmem>>, %arg8: memref<1x128xf32, #tpu.memory_space<vmem>>, %arg9: memref<256x128xf32, #tpu.memory_space<vmem>>, %arg10: memref<256x128xbf16, #tpu.memory_space<vmem>>, %arg11: memref<256x128xf32, #tpu.memory_space<vmem>>) attributes {dimension_semantics = [#tpu.dimension_semantics<parallel>, #tpu.dimension_semantics<arbitrary>], iteration_bounds = array<i64: 2, 1>, scalar_prefetch = 0 : i64, scratch_operands = 2 : i64, tpu.core_type = #tpu.core_type<tc>, window_params = [{transform_indices = @transform_0, window_bounds = array<i64: 256, 128>}, {pipeline_mode = #tpu.pipeline_mode<synchronous>, transform_indices = @transform_1, window_bounds = array<i64: 1, 128>}, {pipeline_mode = #tpu.pipeline_mode<synchronous>, transform_indices = @transform_2, window_bounds = array<i64: 1, 128>}, {transform_indices = @transform_3, window_bounds = array<i64: 128, 256>}, {transform_indices = @transform_4, window_bounds = array<i64: 1, 256>}, {transform_indices = @transform_5, window_bounds = array<i64: 256, 128>}, {pipeline_mode = #tpu.pipeline_mode<synchronous>, transform_indices = @transform_6, window_bounds = array<i64: 1, 128>}, {transform_indices = @transform_7, window_bounds = array<i64: 256, 128>}]} {
    %c0_i32 = arith.constant 0 : i32
    %0 = arith.cmpi eq, %arg1, %c0_i32 : i32
    %1 = arith.extui %0 : i1 to i32
    %c0_i32_0 = arith.constant 0 : i32
    %2 = arith.cmpi ne, %1, %c0_i32_0 : i32
    scf.if %2 {
      %c0_19 = arith.constant 0 : index
      %c0_20 = arith.constant 0 : index
      %31 = vector.load %arg2[%c0_19, %c0_20] : memref<256x128xf32, #tpu.memory_space<vmem>>, vector<256x128xf32>
      %cst_21 = arith.constant dense<0.000000e+00> : vector<256xf32>
      %32 = vector.multi_reduction <add>, %31, %cst_21 [1] : vector<256x128xf32> to vector<256xf32>
      %33 = vector.shape_cast %32 : vector<256xf32> to vector<256x1xf32>
      %cst_22 = arith.constant 1.280000e+02 : f32
      %34 = vector.broadcast %cst_22 : f32 to vector<256x1xf32>
      %35 = arith.divf %33, %34 : vector<256x1xf32>
      %36 = vector.broadcast %35 : vector<256x1xf32> to vector<256x128xf32>
      %37 = arith.subf %31, %36 : vector<256x128xf32>
      %38 = arith.mulf %37, %37 : vector<256x128xf32>
      %cst_23 = arith.constant dense<0.000000e+00> : vector<256xf32>
      %39 = vector.multi_reduction <add>, %38, %cst_23 [1] : vector<256x128xf32> to vector<256xf32>
      %40 = vector.shape_cast %39 : vector<256xf32> to vector<256x1xf32>
      %cst_24 = arith.constant 1.280000e+02 : f32
      %41 = vector.broadcast %cst_24 : f32 to vector<256x1xf32>
      %42 = arith.divf %40, %41 : vector<256x1xf32>
      %43 = vector.broadcast %35 : vector<256x1xf32> to vector<256x128xf32>
      %44 = arith.subf %31, %43 : vector<256x128xf32>
      %cst_25 = arith.constant 9.99999974E-6 : f32
      %45 = vector.broadcast %cst_25 : f32 to vector<256x1xf32>
      %46 = arith.addf %42, %45 : vector<256x1xf32>
      %47 = math.rsqrt %46 : vector<256x1xf32>
      %48 = vector.broadcast %47 : vector<256x1xf32> to vector<256x128xf32>
      %49 = arith.mulf %44, %48 : vector<256x128xf32>
      %c0_26 = arith.constant 0 : index
      %c0_27 = arith.constant 0 : index
      %50 = vector.load %arg3[%c0_26, %c0_27] : memref<1x128xf32, #tpu.memory_space<vmem>>, vector<1x128xf32>
      %51 = vector.broadcast %50 : vector<1x128xf32> to vector<256x128xf32>
      %52 = arith.mulf %49, %51 : vector<256x128xf32>
      %c0_28 = arith.constant 0 : index
      %c0_29 = arith.constant 0 : index
      %53 = vector.load %arg4[%c0_28, %c0_29] : memref<1x128xf32, #tpu.memory_space<vmem>>, vector<1x128xf32>
      %54 = vector.broadcast %53 : vector<1x128xf32> to vector<256x128xf32>
      %55 = arith.addf %52, %54 : vector<256x128xf32>
      %56 = arith.truncf %55 : vector<256x128xf32> to vector<256x128xbf16>
      %c0_30 = arith.constant 0 : index
      %c0_31 = arith.constant 0 : index
      %57 = vector.load %arg10[%c0_30, %c0_31] : memref<256x128xbf16, #tpu.memory_space<vmem>>, vector<256x128xbf16>
      tpu.vector_store %arg10[%c0_30, %c0_31], %56 {strides = array<i32>} : memref<256x128xbf16, #tpu.memory_space<vmem>>, vector<256x128xbf16>,
      %cst_32 = arith.constant 0.000000e+00 : f32
      %58 = vector.broadcast %cst_32 : f32 to vector<256x128xf32>
      %c0_33 = arith.constant 0 : index
      %c0_34 = arith.constant 0 : index
      %59 = vector.load %arg11[%c0_33, %c0_34] : memref<256x128xf32, #tpu.memory_space<vmem>>, vector<256x128xf32>
      tpu.vector_store %arg11[%c0_33, %c0_34], %58 {strides = array<i32>} : memref<256x128xf32, #tpu.memory_space<vmem>>, vector<256x128xf32>,
    } else {
    }
    %c0 = arith.constant 0 : index
    %c0_1 = arith.constant 0 : index
    %3 = vector.load %arg10[%c0, %c0_1] : memref<256x128xbf16, #tpu.memory_space<vmem>>, vector<256x128xbf16>
    %c0_2 = arith.constant 0 : index
    %c0_3 = arith.constant 0 : index
    %4 = vector.load %arg5[%c0_2, %c0_3] : memref<128x256xbf16, #tpu.memory_space<vmem>>, vector<128x256xbf16>
    %cst = arith.constant dense<0.000000e+00> : vector<256x256xf32>
    %5 = tpu.matmul %3, %4, %cst {dimension_numbers = #tpu.dot_dimension_numbers<[1], [0], [0], [1], [0, 0, 1, 1], [], []>} : vector<256x128xbf16>, vector<128x256xbf16>, vector<256x256xf32> -> vector<256x256xf32>
    %c0_4 = arith.constant 0 : index
    %c0_5 = arith.constant 0 : index
    %6 = vector.load %arg6[%c0_4, %c0_5] : memref<1x256xf32, #tpu.memory_space<vmem>>, vector<1x256xf32>
    %7 = vector.broadcast %6 : vector<1x256xf32> to vector<256x256xf32>
    %8 = arith.addf %5, %7 : vector<256x256xf32>
    %9 = arith.mulf %8, %8 : vector<256x256xf32>
    %10 = arith.mulf %8, %9 : vector<256x256xf32>
    %cst_6 = arith.constant 4.471500e-02 : f32
    %11 = vector.broadcast %cst_6 : f32 to vector<256x256xf32>
    %12 = arith.mulf %11, %10 : vector<256x256xf32>
    %13 = arith.addf %8, %12 : vector<256x256xf32>
    %cst_7 = arith.constant 0.797884583 : f32
    %14 = vector.broadcast %cst_7 : f32 to vector<256x256xf32>
    %15 = arith.mulf %14, %13 : vector<256x256xf32>
    %16 = math.tanh %15 : vector<256x256xf32>
    %cst_8 = arith.constant 1.000000e+00 : f32
    %17 = vector.broadcast %cst_8 : f32 to vector<256x256xf32>
    %18 = arith.addf %17, %16 : vector<256x256xf32>
    %cst_9 = arith.constant 5.000000e-01 : f32
    %19 = vector.broadcast %cst_9 : f32 to vector<256x256xf32>
    %20 = arith.mulf %19, %18 : vector<256x256xf32>
    %21 = arith.mulf %8, %20 : vector<256x256xf32>
    %c0_10 = arith.constant 0 : index
    %c0_11 = arith.constant 0 : index
    %22 = vector.load %arg11[%c0_10, %c0_11] : memref<256x128xf32, #tpu.memory_space<vmem>>, vector<256x128xf32>
    %23 = arith.truncf %21 : vector<256x256xf32> to vector<256x256xbf16>
    %c0_12 = arith.constant 0 : index
    %c0_13 = arith.constant 0 : index
    %24 = vector.load %arg7[%c0_12, %c0_13] : memref<256x128xbf16, #tpu.memory_space<vmem>>, vector<256x128xbf16>
    %cst_14 = arith.constant dense<0.000000e+00> : vector<256x128xf32>
    %25 = tpu.matmul %23, %24, %cst_14 {dimension_numbers = #tpu.dot_dimension_numbers<[1], [0], [0], [1], [0, 0, 1, 1], [], []>} : vector<256x256xbf16>, vector<256x128xbf16>, vector<256x128xf32> -> vector<256x128xf32>
    %26 = arith.addf %22, %25 : vector<256x128xf32>
    %c0_15 = arith.constant 0 : index
    %c0_16 = arith.constant 0 : index
    %27 = vector.load %arg11[%c0_15, %c0_16] : memref<256x128xf32, #tpu.memory_space<vmem>>, vector<256x128xf32>
    tpu.vector_store %arg11[%c0_15, %c0_16], %26 {strides = array<i32>} : memref<256x128xf32, #tpu.memory_space<vmem>>, vector<256x128xf32>,
    %c0_i32_17 = arith.constant 0 : i32
    %28 = arith.cmpi eq, %arg1, %c0_i32_17 : i32
    %29 = arith.extui %28 : i1 to i32
    %c0_i32_18 = arith.constant 0 : i32
    %30 = arith.cmpi ne, %29, %c0_i32_18 : i32
    scf.if %30 {
      %c0_19 = arith.constant 0 : index
      %c0_20 = arith.constant 0 : index
      %31 = vector.load %arg11[%c0_19, %c0_20] : memref<256x128xf32, #tpu.memory_space<vmem>>, vector<256x128xf32>
      %c0_21 = arith.constant 0 : index
      %c0_22 = arith.constant 0 : index
      %32 = vector.load %arg8[%c0_21, %c0_22] : memref<1x128xf32, #tpu.memory_space<vmem>>, vector<1x128xf32>
      %33 = vector.broadcast %32 : vector<1x128xf32> to vector<256x128xf32>
      %34 = arith.addf %31, %33 : vector<256x128xf32>
      %c0_23 = arith.constant 0 : index
      %c0_24 = arith.constant 0 : index
      %35 = vector.load %arg9[%c0_23, %c0_24] : memref<256x128xf32, #tpu.memory_space<vmem>>, vector<256x128xf32>
      tpu.vector_store %arg9[%c0_23, %c0_24], %34 {strides = array<i32>} : memref<256x128xf32, #tpu.memory_space<vmem>>, vector<256x128xf32>,
    } else {
    }
    return
  }
  func.func @transform_0(%arg0: i32, %arg1: i32) -> (i32, i32) {
    %c0_i32 = arith.constant 0 : i32
    %c0_i32_0 = arith.constant 0 : i32
    return %arg0, %c0_i32 : i32, i32
  }
  func.func @transform_1(%arg0: i32, %arg1: i32) -> (i32, i32) {
    %c0_i32 = arith.constant 0 : i32
    %c0_i32_0 = arith.constant 0 : i32
    %c0_i32_1 = arith.constant 0 : i32
    return %c0_i32, %c0_i32_0 : i32, i32
  }
  func.func @transform_2(%arg0: i32, %arg1: i32) -> (i32, i32) {
    %c0_i32 = arith.constant 0 : i32
    %c0_i32_0 = arith.constant 0 : i32
    %c0_i32_1 = arith.constant 0 : i32
    return %c0_i32, %c0_i32_0 : i32, i32
  }
  func.func @transform_3(%arg0: i32, %arg1: i32) -> (i32, i32) {
    %c0_i32 = arith.constant 0 : i32
    %c0_i32_0 = arith.constant 0 : i32
    return %c0_i32, %arg1 : i32, i32
  }
  func.func @transform_4(%arg0: i32, %arg1: i32) -> (i32, i32) {
    %c0_i32 = arith.constant 0 : i32
    %c0_i32_0 = arith.constant 0 : i32
    return %c0_i32, %arg1 : i32, i32
  }
  func.func @transform_5(%arg0: i32, %arg1: i32) -> (i32, i32) {
    %c0_i32 = arith.constant 0 : i32
    %c0_i32_0 = arith.constant 0 : i32
    return %arg1, %c0_i32 : i32, i32
  }
  func.func @transform_6(%arg0: i32, %arg1: i32) -> (i32, i32) {
    %c0_i32 = arith.constant 0 : i32
    %c0_i32_0 = arith.constant 0 : i32
    %c0_i32_1 = arith.constant 0 : i32
    return %c0_i32, %c0_i32_0 : i32, i32
  }
  func.func @transform_7(%arg0: i32, %arg1: i32) -> (i32, i32) {
    %c0_i32 = arith.constant 0 : i32
    %c0_i32_0 = arith.constant 0 : i32
    return %arg0, %c0_i32 : i32, i32
  }
}

</mosaic_0001>

<llo_original>
// kernel: tpu_custom_call.1
$region0: #{tpu_custom_call.1}
  #allocation0 [shape = 'u32[]', space=smem, size = 0x4, offset = 0x4, fixed_abs, tag = 'smem constant byte address 0x4 - core index']
  #allocation1 [shape = 'u32[144,128]{1,0:T(1,128)}', space=vmem, size = 0x12000, scoped, tag = 'internal scratch']
  #allocation2 [shape = 'bf16[256,128]{1,0:T(16,128)(2,1)}', space=vmem, size = 0x10000, scoped, tag = 'scratch operand']
  #allocation3 [shape = 'f32[256,128]{1,0:T(8,128)}', space=vmem, size = 0x20000, scoped, tag = 'scratch operand']
  %s0 = inlined_call_operand.hbm [shape: f32[512,128], index: 0, kind: input, shape index: {}]
  %s1 = inlined_call_operand.vmem [shape: f32[1,128], index: 1, kind: input, shape index: {}]
  %s2 = inlined_call_operand.vmem [shape: f32[1,128], index: 2, kind: input, shape index: {}]
  %s3 = inlined_call_operand.hbm [shape: bf16[128,256], index: 3, kind: input, shape index: {}]
  %s4 = inlined_call_operand.vmem [shape: f32[1,256], index: 4, kind: input, shape index: {}]
  %s5 = inlined_call_operand.hbm [shape: bf16[256,128], index: 5, kind: input, shape index: {}]
  %s6 = inlined_call_operand.vmem [shape: f32[1,128], index: 6, kind: input, shape index: {}]
  %s7 = inlined_call_operand.hbm [shape: f32[512,128], index: 7, kind: output, shape index: {}]
  %s8 = sld [smem:[#allocation0]]
  $region81: #{tpu_custom_call.1} parent=0
    _
  %s10 = ssub.s32 1, %s8
  %s11 = scalar_select 0, %s10, %s8
  $region1: #{tpu_custom_call.1} parent=0
    #allocation4 [shape = 'u8[262144]{0}', space=vmem, size = 0x40000, scoped, tag = 'input window, operand 0']
    #allocation5 [shape = 's32[2]{0}', space=sflag, size = 0x8, scoped, tag = 'scoped memory for tpu_custom_call.1']
    #allocation6 [shape = 's32[2]{0}', space=sflag, size = 0x8, scoped, tag = 'scoped memory for tpu_custom_call.1']
    #allocation7 [shape = 'u8[65536]{0}', space=vmem, size = 0x10000, scoped, tag = 'input window, operand 3, single buffered']
    #allocation8 [shape = 's32[1]{0}', space=sflag, size = 0x4, scoped, tag = 'scoped memory for tpu_custom_call.1']
    #allocation9 [shape = 'u8[65536]{0}', space=vmem, size = 0x10000, scoped, tag = 'input window, operand 5, single buffered']
    #allocation10 [shape = 'u8[262144]{0}', space=vmem, size = 0x40000, scoped, tag = 'output window, operand 0']
    %12 = vsyncpa [#allocation5], 0
    %s13 = scalar_lea.sflag [#allocation5], 1
    %14 = vsyncpa %s13, 0
    %15 = vsyncpa [#allocation8], 0
    %16 = vsyncpa [#allocation6], 0
    %s17 = scalar_lea.sflag [#allocation6], 1
    %18 = vsyncpa %s17, 0
    loop: start=0, step=1, limit=4
    $region2: #{tpu_custom_call.1} parent=1 // loop_pre_header
      _
    $region3: #{tpu_custom_call.1} parent=1 // loop_header
      %s20 = sphi 0, %s24
      %p21 = scmp.ge.s32.totalorder %s20, 4
      %s27 = sphi 0, %s39
      %s28 = sphi 0, %s35
      %s29 = sphi 0, %s27
      %s30 = sphi 0, %s28
      %s31 = sphi 0, %s29
      %s32 = sphi 0, %s30
      %s42 = sphi 0, %s44
      %s45 = sphi 0, %s42
      %s46 = sphi 0, %s45
      %s62 = sphi 0, %s46
      %s66 = sphi 0, %s66
      %s68 = sphi 0, %s66
      %s69 = sphi 0, %s68
      %s83 = sphi 0, %s69
      %s87 = sphi 0, %s87
      %s89 = sphi 0, %s87
      %s90 = sphi 0, %s89
      %s104 = sphi 0, %s90
      %s110 = sphi 0, %s112
      %s113 = sphi 0, %s110
      %s114 = sphi 0, %s113
      %s130 = sphi 0, %s114
      %s136 = sphi 0, %s138
      %s139 = sphi 0, %s136
      %s140 = sphi 0, %s139
      %s156 = sphi 0, %s140
      %s162 = sphi 0, %s164
      %s165 = sphi 0, %s162
      %s166 = sphi 0, %s165
      %s182 = sphi 0, %s166
      %s186 = sphi 0, %s186
      %s188 = sphi 0, %s186
      %s189 = sphi 0, %s188
      %s203 = sphi 0, %s189
      %s209 = sphi 0, %s211
      %s212 = sphi 0, %s209
      %s213 = sphi 0, %s212
      %s229 = sphi 0, %s213
    $region4: #{tpu_custom_call.1} parent=1 // loop_header_branch
      %23 = sbr.rel (%p21) target = $region8
    $region5: #{tpu_custom_call.1} parent=1 // loop_body
      %s25 = ssub.s32 %s20, 1
      %s26 = ssub.s32 %s20, 2
      %s33 = sadd.s32 1, %s28
      %p34 = scmp.ge.s32.totalorder %s33, 1
      %s35 = scalar_select %p34, 0, %s33
      %s36 = sadd.s32 1, %s27
      %s37 = scalar_select %p34, %s36, %s27
      %p38 = scmp.ge.s32.totalorder %s37, 2
      %s39 = scalar_select %p38, 0, %s37
      %s40 = ssub.s32 %s27, %s39
      %p41 = scmp.eq.s32.totalorder %s40, 0
      %s43 = sadd.s32 %s42, 1
      %s44 = scalar_select %p41, %s42, %s43
      %p47 = pneg %p41
      %p48 = scmp.eq.s32.totalorder %s20, 1
      %p49 = por %p47, %p48
      %p50 = scmp.ne.s32.totalorder %s42, %s45
      %p51 = scmp.eq.s32.totalorder %s20, 0
      %p52 = por %p50, %p51
      %p53 = scmp.ne.s32.totalorder %s42, %s45
      %p54 = scmp.eq.s32.totalorder %s25, 1
      %p55 = por %p53, %p54
      %p56 = scmp.ne.s32.totalorder %s45, %s46
      %p57 = scmp.eq.s32.totalorder %s25, 0
      %p58 = por %p56, %p57
      %p59 = scmp.ne.s32.totalorder %s45, %s46
      %p60 = scmp.eq.s32.totalorder %s26, 1
      %p61 = por %p59, %p60
      %p63 = scmp.ne.s32.totalorder %s46, %s62
      %p64 = scmp.eq.s32.totalorder %s26, 0
      %p65 = por %p63, %p64
      %s67 = sadd.s32 %s66, 1
      %p70 = scmp.eq.s32.totalorder %s20, 1
      %p71 = scmp.ne.s32.totalorder %s66, %s68
      %p72 = scmp.eq.s32.totalorder %s20, 0
      %p73 = por %p71, %p72
      %p74 = scmp.ne.s32.totalorder %s66, %s68
      %p75 = scmp.eq.s32.totalorder %s25, 1
      %p76 = por %p74, %p75
      %p77 = scmp.ne.s32.totalorder %s68, %s69
      %p78 = scmp.eq.s32.totalorder %s25, 0
      %p79 = por %p77, %p78
      %p80 = scmp.ne.s32.totalorder %s68, %s69
      %p81 = scmp.eq.s32.totalorder %s26, 1
      %p82 = por %p80, %p81
      %p84 = scmp.ne.s32.totalorder %s69, %s83
      %p85 = scmp.eq.s32.totalorder %s26, 0
      %p86 = por %p84, %p85
      %s88 = sadd.s32 %s87, 1
      %p91 = scmp.eq.s32.totalorder %s20, 1
      %p92 = scmp.ne.s32.totalorder %s87, %s89
      %p93 = scmp.eq.s32.totalorder %s20, 0
      %p94 = por %p92, %p93
      %p95 = scmp.ne.s32.totalorder %s87, %s89
      %p96 = scmp.eq.s32.totalorder %s25, 1
      %p97 = por %p95, %p96
      %p98 = scmp.ne.s32.totalorder %s89, %s90
      %p99 = scmp.eq.s32.totalorder %s25, 0
      %p100 = por %p98, %p99
      %p101 = scmp.ne.s32.totalorder %s89, %s90
      %p102 = scmp.eq.s32.totalorder %s26, 1
      %p103 = por %p101, %p102
      %p105 = scmp.ne.s32.totalorder %s90, %s104
      %p106 = scmp.eq.s32.totalorder %s26, 0
      %p107 = por %p105, %p106
      %s108 = ssub.s32 %s28, %s35
      %p109 = scmp.eq.s32.totalorder %s108, 0
      %s111 = sadd.s32 %s110, 1
      %s112 = scalar_select %p109, %s110, %s111
      %p115 = pneg %p109
      %p116 = scmp.eq.s32.totalorder %s20, 1
      %p117 = por %p115, %p116
      %p118 = scmp.ne.s32.totalorder %s110, %s113
      %p119 = scmp.eq.s32.totalorder %s20, 0
      %p120 = por %p118, %p119
      %p121 = scmp.ne.s32.totalorder %s110, %s113
      %p122 = scmp.eq.s32.totalorder %s25, 1
      %p123 = por %p121, %p122
      %p124 = scmp.ne.s32.totalorder %s113, %s114
      %p125 = scmp.eq.s32.totalorder %s25, 0
      %p126 = por %p124, %p125
      %p127 = scmp.ne.s32.totalorder %s113, %s114
      %p128 = scmp.eq.s32.totalorder %s26, 1
      %p129 = por %p127, %p128
      %p131 = scmp.ne.s32.totalorder %s114, %s130
      %p132 = scmp.eq.s32.totalorder %s26, 0
      %p133 = por %p131, %p132
      %s134 = ssub.s32 %s28, %s35
      %p135 = scmp.eq.s32.totalorder %s134, 0
      %s137 = sadd.s32 %s136, 1
      %s138 = scalar_select %p135, %s136, %s137
      %p141 = pneg %p135
      %p142 = scmp.eq.s32.totalorder %s20, 1
      %p143 = por %p141, %p142
      %p144 = scmp.ne.s32.totalorder %s136, %s139
      %p145 = scmp.eq.s32.totalorder %s20, 0
      %p146 = por %p144, %p145
      %p147 = scmp.ne.s32.totalorder %s136, %s139
      %p148 = scmp.eq.s32.totalorder %s25, 1
      %p149 = por %p147, %p148
      %p150 = scmp.ne.s32.totalorder %s139, %s140
      %p151 = scmp.eq.s32.totalorder %s25, 0
      %p152 = por %p150, %p151
      %p153 = scmp.ne.s32.totalorder %s139, %s140
      %p154 = scmp.eq.s32.totalorder %s26, 1
      %p155 = por %p153, %p154
      %p157 = scmp.ne.s32.totalorder %s140, %s156
      %p158 = scmp.eq.s32.totalorder %s26, 0
      %p159 = por %p157, %p158
      %s160 = ssub.s32 %s28, %s35
      %p161 = scmp.eq.s32.totalorder %s160, 0
      %s163 = sadd.s32 %s162, 1
      %s164 = scalar_select %p161, %s162, %s163
      %p167 = pneg %p161
      %p168 = scmp.eq.s32.totalorder %s20, 1
      %p169 = por %p167, %p168
      %p170 = scmp.ne.s32.totalorder %s162, %s165
      %p171 = scmp.eq.s32.totalorder %s20, 0
      %p172 = por %p170, %p171
      %p173 = scmp.ne.s32.totalorder %s162, %s165
      %p174 = scmp.eq.s32.totalorder %s25, 1
      %p175 = por %p173, %p174
      %p176 = scmp.ne.s32.totalorder %s165, %s166
      %p177 = scmp.eq.s32.totalorder %s25, 0
      %p178 = por %p176, %p177
      %p179 = scmp.ne.s32.totalorder %s165, %s166
      %p180 = scmp.eq.s32.totalorder %s26, 1
      %p181 = por %p179, %p180
      %p183 = scmp.ne.s32.totalorder %s166, %s182
      %p184 = scmp.eq.s32.totalorder %s26, 0
      %p185 = por %p183, %p184
      %s187 = sadd.s32 %s186, 1
      %p190 = scmp.eq.s32.totalorder %s20, 1
      %p191 = scmp.ne.s32.totalorder %s186, %s188
      %p192 = scmp.eq.s32.totalorder %s20, 0
      %p193 = por %p191, %p192
      %p194 = scmp.ne.s32.totalorder %s186, %s188
      %p195 = scmp.eq.s32.totalorder %s25, 1
      %p196 = por %p194, %p195
      %p197 = scmp.ne.s32.totalorder %s188, %s189
      %p198 = scmp.eq.s32.totalorder %s25, 0
      %p199 = por %p197, %p198
      %p200 = scmp.ne.s32.totalorder %s188, %s189
      %p201 = scmp.eq.s32.totalorder %s26, 1
      %p202 = por %p200, %p201
      %p204 = scmp.ne.s32.totalorder %s189, %s203
      %p205 = scmp.eq.s32.totalorder %s26, 0
      %p206 = por %p204, %p205
      %s207 = ssub.s32 %s27, %s39
      %p208 = scmp.eq.s32.totalorder %s207, 0
      %s210 = sadd.s32 %s209, 1
      %s211 = scalar_select %p208, %s209, %s210
      %p214 = pneg %p208
      %p215 = scmp.eq.s32.totalorder %s20, 1
      %p216 = por %p214, %p215
      %p217 = scmp.ne.s32.totalorder %s209, %s212
      %p218 = scmp.eq.s32.totalorder %s20, 0
      %p219 = por %p217, %p218
      %p220 = scmp.ne.s32.totalorder %s209, %s212
      %p221 = scmp.eq.s32.totalorder %s25, 1
      %p222 = por %p220, %p221
      %p223 = scmp.ne.s32.totalorder %s212, %s213
      %p224 = scmp.eq.s32.totalorder %s25, 0
      %p225 = por %p223, %p224
      %p226 = scmp.ne.s32.totalorder %s212, %s213
      %p227 = scmp.eq.s32.totalorder %s26, 1
      %p228 = por %p226, %p227
      %p230 = scmp.ne.s32.totalorder %s213, %s229
      %p231 = scmp.eq.s32.totalorder %s26, 0
      %p232 = por %p230, %p231
      %p233 = scmp.le.s32.totalorder 1, %s20
      %p234 = scmp.lt.s32.totalorder %s20, 3
      %p235 = pnand %p233, %p234
      %p236 = pneg %p235
      // Predicated region
      $region9: #{tpu_custom_call.1} parent=5 // pred_check
        _
      $region10: #{tpu_custom_call.1} parent=5 // pred_check_branch
        %238 = sbr.rel (%p235) target = $region12
      $region11: #{tpu_custom_call.1} parent=5 // pred_region
        %s239 = ssub.s32 %s20, 1
        // Predicated region
        $region13: #{tpu_custom_call.1} parent=11 // pred_check
          %p240 = pneg %p79
        $region14: #{tpu_custom_call.1} parent=11 // pred_check_branch
          %242 = sbr.rel (%p240) target = $region16
        $region15: #{tpu_custom_call.1} parent=11 // pred_region
          _
        $region16: #{tpu_custom_call.1} parent=11 // pred_fallthru
          _
        // Predicated region
        $region17: #{tpu_custom_call.1} parent=11 // pred_check
          %p243 = pneg %p100
        $region18: #{tpu_custom_call.1} parent=11 // pred_check_branch
          %245 = sbr.rel (%p243) target = $region20
        $region19: #{tpu_custom_call.1} parent=11 // pred_region
          _
        $region20: #{tpu_custom_call.1} parent=11 // pred_fallthru
          _
        // Predicated region
        $region21: #{tpu_custom_call.1} parent=11 // pred_check
          %p246 = pneg %p126
        $region22: #{tpu_custom_call.1} parent=11 // pred_check_branch
          %248 = sbr.rel (%p246) target = $region24
        $region23: #{tpu_custom_call.1} parent=11 // pred_region
          %s249 = smul.u32 2, %s30
          %s251 = ssub.s32 2048, 2048
          %252 = vsyncadd [#allocation8], %s251
          %s253 = smul.addr %s249, 64
          %s254 = scalar_lea.hbm %s3, %s253
          %s255 = sshll.u32 [#allocation7], 4
          %s256 = int_to_ptr.vmem [resolvable:$true] %s255
          %261 = dma.hbm_to_vmem [thread:$0]  %s254, 2048, %s256, [#allocation8], 128, 128, 8
        $region24: #{tpu_custom_call.1} parent=11 // pred_fallthru
          _
        // Predicated region
        $region25: #{tpu_custom_call.1} parent=11 // pred_check
          %p262 = pneg %p152
        $region26: #{tpu_custom_call.1} parent=11 // pred_check_branch
          %264 = sbr.rel (%p262) target = $region28
        $region27: #{tpu_custom_call.1} parent=11 // pred_region
          %s265 = smul.u32 2, %s30
          %p266 = scmp.lt.s32.totalorder %s265, 1
          %s267 = scalar_select %p266, %s265, 1
          %s268 = scalar_lea.vmem %s4, %s267
          %s269 = smul.u32 2, %s30
        $region28: #{tpu_custom_call.1} parent=11 // pred_fallthru
          _
        // Predicated region
        $region29: #{tpu_custom_call.1} parent=11 // pred_check
          %p270 = pneg %p178
        $region30: #{tpu_custom_call.1} parent=11 // pred_check_branch
          %272 = sbr.rel (%p270) target = $region32
        $region31: #{tpu_custom_call.1} parent=11 // pred_region
          %s273 = smul.u32 32, %s30
          %s275 = ssub.s32 2048, 2048
          %276 = vsyncadd [#allocation8], %s275
          %s277 = smul.addr %s273, 64
          %s278 = scalar_lea.hbm %s5, %s277
          %s279 = sshll.u32 [#allocation9], 4
          %s280 = int_to_ptr.vmem [resolvable:$true] %s279
          %285 = dma.hbm_to_vmem [thread:$0]  %s278, 2048, %s280, [#allocation8], 64, 64, 4
        $region32: #{tpu_custom_call.1} parent=11 // pred_fallthru
          _
        // Predicated region
        $region33: #{tpu_custom_call.1} parent=11 // pred_check
          %p286 = pneg %p199
        $region34: #{tpu_custom_call.1} parent=11 // pred_check_branch
          %288 = sbr.rel (%p286) target = $region36
        $region35: #{tpu_custom_call.1} parent=11 // pred_region
          _
        $region36: #{tpu_custom_call.1} parent=11 // pred_fallthru
          _
      $region12: #{tpu_custom_call.1} parent=5 // pred_fallthru
        _
      %p289 = scmp.lt.s32.totalorder %s20, 2
      // Predicated region
      $region37: #{tpu_custom_call.1} parent=5 // pred_check
        %p290 = pneg %p289
      $region38: #{tpu_custom_call.1} parent=5 // pred_check_branch
        %292 = sbr.rel (%p290) target = $region40
      $region39: #{tpu_custom_call.1} parent=5 // pred_region
        // Predicated region
        $region41: #{tpu_custom_call.1} parent=39 // pred_check
          %p293 = pneg %p52
        $region42: #{tpu_custom_call.1} parent=39 // pred_check_branch
          %295 = sbr.rel (%p293) target = $region44
        $region43: #{tpu_custom_call.1} parent=39 // pred_region
          %s296 = sand.u32 %s42, 1
          %s297 = scalar_lea.sflag [#allocation5], %s296
          %s298 = sand.u32 %s42, 1
          %s299 = smul.addr %s298, 256
          %s300 = scalar_lea.vmem [#allocation4], %s299
          %s301 = smul.u32 32, %s27
          %s303 = ssub.s32 4096, 4096
          %304 = vsyncadd %s297, %s303
          %s305 = smul.addr %s301, 128
          %s306 = scalar_lea.hbm %s0, %s305
          %s307 = sshll.u32 %s300, 4
          %s308 = int_to_ptr.vmem [resolvable:$true] %s307
          %313 = dma.hbm_to_vmem [thread:$0]  %s306, 4096, %s308, %s297, 128, 128, 8
        $region44: #{tpu_custom_call.1} parent=39 // pred_fallthru
          _
      $region40: #{tpu_custom_call.1} parent=5 // pred_fallthru
        _
      %p314 = scmp.le.s32.totalorder 1, %s20
      %p315 = scmp.lt.s32.totalorder %s20, 3
      %p316 = pnand %p314, %p315
      %p317 = pneg %p316
      // Predicated region
      $region45: #{tpu_custom_call.1} parent=5 // pred_check
        _
      $region46: #{tpu_custom_call.1} parent=5 // pred_check_branch
        %319 = sbr.rel (%p316) target = $region48
      $region47: #{tpu_custom_call.1} parent=5 // pred_region
        %s320 = ssub.s32 %s20, 1
        %s321 = sand.u32 %s45, 1
        %s322 = scalar_lea.sflag [#allocation5], %s321
        %s323 = sand.u32 %s45, 1
        %s324 = smul.addr %s323, 256
        %s325 = scalar_lea.vmem [#allocation4], %s324
        // Predicated region
        $region49: #{tpu_custom_call.1} parent=47 // pred_check
          %p326 = pneg %p58
        $region50: #{tpu_custom_call.1} parent=47 // pred_check_branch
          %328 = sbr.rel (%p326) target = $region52
        $region51: #{tpu_custom_call.1} parent=47 // pred_region
          %329 = dma.done %s322, 4096
        $region52: #{tpu_custom_call.1} parent=47 // pred_fallthru
          _
        // Predicated region
        $region53: #{tpu_custom_call.1} parent=47 // pred_check
          %p330 = pneg %p126
        $region54: #{tpu_custom_call.1} parent=47 // pred_check_branch
          %332 = sbr.rel (%p330) target = $region56
        $region55: #{tpu_custom_call.1} parent=47 // pred_region
          %333 = dma.done [#allocation8], 2048
        $region56: #{tpu_custom_call.1} parent=47 // pred_fallthru
          _
        // Predicated region
        $region57: #{tpu_custom_call.1} parent=47 // pred_check
          %p334 = pneg %p178
        $region58: #{tpu_custom_call.1} parent=47 // pred_check_branch
          %336 = sbr.rel (%p334) target = $region60
        $region59: #{tpu_custom_call.1} parent=47 // pred_region
          %337 = dma.done [#allocation8], 2048
        $region60: #{tpu_custom_call.1} parent=47 // pred_fallthru
          _
        %s338 = sand.u32 %s45, 1
        %s339 = scalar_lea.sflag [#allocation5], %s338
        %s340 = sand.u32 %s45, 1
        %s341 = smul.addr %s340, 256
        %s342 = scalar_lea.vmem [#allocation4], %s341
        %p343 = pneg %p58
        %p344 = pneg %p55
        %p345 = pneg %p79
        %p346 = pneg %p76
        %p347 = pneg %p100
        %p348 = pneg %p97
        %p349 = pneg %p126
        %p350 = pneg %p123
        %s351 = smul.u32 2, %s30
        %p352 = scmp.lt.s32.totalorder %s351, 1
        %s353 = scalar_select %p352, %s351, 1
        %s354 = scalar_lea.vmem %s4, %s353
        %p355 = pneg %p152
        %p356 = pneg %p149
        %p357 = pneg %p178
        %p358 = pneg %p175
        %p359 = pneg %p199
        %p360 = pneg %p196
        %p361 = pneg %p225
        %p362 = pneg %p222
        %s363 = sand.u32 %s212, 1
        %s364 = scalar_lea.sflag [#allocation6], %s363
        %s365 = sand.u32 %s212, 1
        %s366 = smul.addr %s365, 256
        %s367 = scalar_lea.vmem [#allocation10], %s366
        %s368 = smul.u32 32, %s29
        %s369 = smul.u32 2, %s30
        %s370 = smul.u32 2, %s30
        %p371 = scmp.lt.s32.totalorder %s370, 1
        %s372 = scalar_select %p371, %s370, 1
        %s373 = scalar_lea.vmem %s4, %s372
        %s374 = smul.u32 2, %s30
        %s375 = smul.u32 32, %s30
        %s376 = smul.u32 32, %s29
        %p378 = scmp.eq.s32.totalorder %s30, 0
        // Predicated region
        $region61: #{tpu_custom_call.1} parent=47 // pred_check
          %p379 = pneg %p378
        $region62: #{tpu_custom_call.1} parent=47 // pred_check_branch
          %381 = sbr.rel (%p379) target = $region64
        $region63: #{tpu_custom_call.1} parent=47 // pred_region
          %v382 = vld [vmem:[%s325] sm:$0xff]
          %v383 = vld [vmem:[%s325 + $0x8] sm:$0xff]
          %v384 = vld [vmem:[%s325 + $0x10] sm:$0xff]
          %v385 = vld [vmem:[%s325 + $0x18] sm:$0xff]
          %v386 = vld [vmem:[%s325 + $0x20] sm:$0xff]
          %v387 = vld [vmem:[%s325 + $0x28] sm:$0xff]
          %v388 = vld [vmem:[%s325 + $0x30] sm:$0xff]
          %v389 = vld [vmem:[%s325 + $0x38] sm:$0xff]
          %v390 = vld [vmem:[%s325 + $0x40] sm:$0xff]
          %v391 = vld [vmem:[%s325 + $0x48] sm:$0xff]
          %v392 = vld [vmem:[%s325 + $0x50] sm:$0xff]
          %v393 = vld [vmem:[%s325 + $0x58] sm:$0xff]
          %v394 = vld [vmem:[%s325 + $0x60] sm:$0xff]
          %v395 = vld [vmem:[%s325 + $0x68] sm:$0xff]
          %v396 = vld [vmem:[%s325 + $0x70] sm:$0xff]
          %v397 = vld [vmem:[%s325 + $0x78] sm:$0xff]
          %v398 = vld [vmem:[%s325 + $0x80] sm:$0xff]
          %v399 = vld [vmem:[%s325 + $0x88] sm:$0xff]
          %v400 = vld [vmem:[%s325 + $0x90] sm:$0xff]
          %v401 = vld [vmem:[%s325 + $0x98] sm:$0xff]
          %v402 = vld [vmem:[%s325 + $0xa0] sm:$0xff]
          %v403 = vld [vmem:[%s325 + $0xa8] sm:$0xff]
          %v404 = vld [vmem:[%s325 + $0xb0] sm:$0xff]
          %v405 = vld [vmem:[%s325 + $0xb8] sm:$0xff]
          %v406 = vld [vmem:[%s325 + $0xc0] sm:$0xff]
          %v407 = vld [vmem:[%s325 + $0xc8] sm:$0xff]
          %v408 = vld [vmem:[%s325 + $0xd0] sm:$0xff]
          %v409 = vld [vmem:[%s325 + $0xd8] sm:$0xff]
          %v410 = vld [vmem:[%s325 + $0xe0] sm:$0xff]
          %v411 = vld [vmem:[%s325 + $0xe8] sm:$0xff]
          %v412 = vld [vmem:[%s325 + $0xf0] sm:$0xff]
          %v413 = vld [vmem:[%s325 + $0xf8] sm:$0xff]
          %414 = vadd.xlane.f32.xlu0 %v382
          %v415 = vpop.xlane.xlu0 %414
          %416 = vadd.xlane.f32.xlu0 %v383
          %v417 = vpop.xlane.xlu0 %416
          %418 = vadd.xlane.f32.xlu0 %v384
          %v419 = vpop.xlane.xlu0 %418
          %420 = vadd.xlane.f32.xlu0 %v385
          %v421 = vpop.xlane.xlu0 %420
          %422 = vadd.xlane.f32.xlu0 %v386
          %v423 = vpop.xlane.xlu0 %422
          %424 = vadd.xlane.f32.xlu0 %v387
          %v425 = vpop.xlane.xlu0 %424
          %426 = vadd.xlane.f32.xlu0 %v388
          %v427 = vpop.xlane.xlu0 %426
          %428 = vadd.xlane.f32.xlu0 %v389
          %v429 = vpop.xlane.xlu0 %428
          %430 = vadd.xlane.f32.xlu0 %v390
          %v431 = vpop.xlane.xlu0 %430
          %432 = vadd.xlane.f32.xlu0 %v391
          %v433 = vpop.xlane.xlu0 %432
          %434 = vadd.xlane.f32.xlu0 %v392
          %v435 = vpop.xlane.xlu0 %434
          %436 = vadd.xlane.f32.xlu0 %v393
          %v437 = vpop.xlane.xlu0 %436
          %438 = vadd.xlane.f32.xlu0 %v394
          %v439 = vpop.xlane.xlu0 %438
          %440 = vadd.xlane.f32.xlu0 %v395
          %v441 = vpop.xlane.xlu0 %440
          %442 = vadd.xlane.f32.xlu0 %v396
          %v443 = vpop.xlane.xlu0 %442
          %444 = vadd.xlane.f32.xlu0 %v397
          %v445 = vpop.xlane.xlu0 %444
          %446 = vadd.xlane.f32.xlu0 %v398
          %v447 = vpop.xlane.xlu0 %446
          %448 = vadd.xlane.f32.xlu0 %v399
          %v449 = vpop.xlane.xlu0 %448
          %450 = vadd.xlane.f32.xlu0 %v400
          %v451 = vpop.xlane.xlu0 %450
          %452 = vadd.xlane.f32.xlu0 %v401
          %v453 = vpop.xlane.xlu0 %452
          %454 = vadd.xlane.f32.xlu0 %v402
          %v455 = vpop.xlane.xlu0 %454
          %456 = vadd.xlane.f32.xlu0 %v403
          %v457 = vpop.xlane.xlu0 %456
          %458 = vadd.xlane.f32.xlu0 %v404
          %v459 = vpop.xlane.xlu0 %458
          %460 = vadd.xlane.f32.xlu0 %v405
          %v461 = vpop.xlane.xlu0 %460
          %462 = vadd.xlane.f32.xlu0 %v406
          %v463 = vpop.xlane.xlu0 %462
          %464 = vadd.xlane.f32.xlu0 %v407
          %v465 = vpop.xlane.xlu0 %464
          %466 = vadd.xlane.f32.xlu0 %v408
          %v467 = vpop.xlane.xlu0 %466
          %468 = vadd.xlane.f32.xlu0 %v409
          %v469 = vpop.xlane.xlu0 %468
          %470 = vadd.xlane.f32.xlu0 %v410
          %v471 = vpop.xlane.xlu0 %470
          %472 = vadd.xlane.f32.xlu0 %v411
          %v473 = vpop.xlane.xlu0 %472
          %474 = vadd.xlane.f32.xlu0 %v412
          %v475 = vpop.xlane.xlu0 %474
          %476 = vadd.xlane.f32.xlu0 %v413
          %v477 = vpop.xlane.xlu0 %476
          %v478 = vrcp.pop 128.0
          %v479 = vmul.f32 %v415, %v478
          %v480 = vmul.f32 %v417, %v478
          %v481 = vmul.f32 %v419, %v478
          %v482 = vmul.f32 %v421, %v478
          %v483 = vmul.f32 %v423, %v478
          %v484 = vmul.f32 %v425, %v478
          %v485 = vmul.f32 %v427, %v478
          %v486 = vmul.f32 %v429, %v478
          %v487 = vmul.f32 %v431, %v478
          %v488 = vmul.f32 %v433, %v478
          %v489 = vmul.f32 %v435, %v478
          %v490 = vmul.f32 %v437, %v478
          %v491 = vmul.f32 %v439, %v478
          %v492 = vmul.f32 %v441, %v478
          %v493 = vmul.f32 %v443, %v478
          %v494 = vmul.f32 %v445, %v478
          %v495 = vmul.f32 %v447, %v478
          %v496 = vmul.f32 %v449, %v478
          %v497 = vmul.f32 %v451, %v478
          %v498 = vmul.f32 %v453, %v478
          %v499 = vmul.f32 %v455, %v478
          %v500 = vmul.f32 %v457, %v478
          %v501 = vmul.f32 %v459, %v478
          %v502 = vmul.f32 %v461, %v478
          %v503 = vmul.f32 %v463, %v478
          %v504 = vmul.f32 %v465, %v478
          %v505 = vmul.f32 %v467, %v478
          %v506 = vmul.f32 %v469, %v478
          %v507 = vmul.f32 %v471, %v478
          %v508 = vmul.f32 %v473, %v478
          %v509 = vmul.f32 %v475, %v478
          %v510 = vmul.f32 %v477, %v478
          %v511 = vsub.f32 %v382, %v479
          %v512 = vsub.f32 %v383, %v480
          %v513 = vsub.f32 %v384, %v481
          %v514 = vsub.f32 %v385, %v482
          %v515 = vsub.f32 %v386, %v483
          %v516 = vsub.f32 %v387, %v484
          %v517 = vsub.f32 %v388, %v485
          %v518 = vsub.f32 %v389, %v486
          %v519 = vsub.f32 %v390, %v487
          %v520 = vsub.f32 %v391, %v488
          %v521 = vsub.f32 %v392, %v489
          %v522 = vsub.f32 %v393, %v490
          %v523 = vsub.f32 %v394, %v491
          %v524 = vsub.f32 %v395, %v492
          %v525 = vsub.f32 %v396, %v493
          %v526 = vsub.f32 %v397, %v494
          %v527 = vsub.f32 %v398, %v495
          %v528 = vsub.f32 %v399, %v496
          %v529 = vsub.f32 %v400, %v497
          %v530 = vsub.f32 %v401, %v498
          %v531 = vsub.f32 %v402, %v499
          %v532 = vsub.f32 %v403, %v500
          %v533 = vsub.f32 %v404, %v501
          %v534 = vsub.f32 %v405, %v502
          %v535 = vsub.f32 %v406, %v503
          %v536 = vsub.f32 %v407, %v504
          %v537 = vsub.f32 %v408, %v505
          %v538 = vsub.f32 %v409, %v506
          %v539 = vsub.f32 %v410, %v507
          %v540 = vsub.f32 %v411, %v508
          %v541 = vsub.f32 %v412, %v509
          %v542 = vsub.f32 %v413, %v510
          %v543 = vmul.f32 %v511, %v511
          %v544 = vmul.f32 %v512, %v512
          %v545 = vmul.f32 %v513, %v513
          %v546 = vmul.f32 %v514, %v514
          %v547 = vmul.f32 %v515, %v515
          %v548 = vmul.f32 %v516, %v516
          %v549 = vmul.f32 %v517, %v517
          %v550 = vmul.f32 %v518, %v518
          %v551 = vmul.f32 %v519, %v519
          %v552 = vmul.f32 %v520, %v520
          %v553 = vmul.f32 %v521, %v521
          %v554 = vmul.f32 %v522, %v522
          %v555 = vmul.f32 %v523, %v523
          %v556 = vmul.f32 %v524, %v524
          %v557 = vmul.f32 %v525, %v525
          %v558 = vmul.f32 %v526, %v526
          %v559 = vmul.f32 %v527, %v527
          %v560 = vmul.f32 %v528, %v528
          %v561 = vmul.f32 %v529, %v529
          %v562 = vmul.f32 %v530, %v530
          %v563 = vmul.f32 %v531, %v531
          %v564 = vmul.f32 %v532, %v532
          %v565 = vmul.f32 %v533, %v533
          %v566 = vmul.f32 %v534, %v534
          %v567 = vmul.f32 %v535, %v535
          %v568 = vmul.f32 %v536, %v536
          %v569 = vmul.f32 %v537, %v537
          %v570 = vmul.f32 %v538, %v538
          %v571 = vmul.f32 %v539, %v539
          %v572 = vmul.f32 %v540, %v540
          %v573 = vmul.f32 %v541, %v541
          %v574 = vmul.f32 %v542, %v542
          %575 = vadd.xlane.f32.xlu0 %v543
          %v576 = vpop.xlane.xlu0 %575
          %577 = vadd.xlane.f32.xlu0 %v544
          %v578 = vpop.xlane.xlu0 %577
          %579 = vadd.xlane.f32.xlu0 %v545
          %v580 = vpop.xlane.xlu0 %579
          %581 = vadd.xlane.f32.xlu0 %v546
          %v582 = vpop.xlane.xlu0 %581
          %583 = vadd.xlane.f32.xlu0 %v547
          %v584 = vpop.xlane.xlu0 %583
          %585 = vadd.xlane.f32.xlu0 %v548
          %v586 = vpop.xlane.xlu0 %585
          %587 = vadd.xlane.f32.xlu0 %v549
          %v588 = vpop.xlane.xlu0 %587
          %589 = vadd.xlane.f32.xlu0 %v550
          %v590 = vpop.xlane.xlu0 %589
          %591 = vadd.xlane.f32.xlu0 %v551
          %v592 = vpop.xlane.xlu0 %591
          %593 = vadd.xlane.f32.xlu0 %v552
          %v594 = vpop.xlane.xlu0 %593
          %595 = vadd.xlane.f32.xlu0 %v553
          %v596 = vpop.xlane.xlu0 %595
          %597 = vadd.xlane.f32.xlu0 %v554
          %v598 = vpop.xlane.xlu0 %597
          %599 = vadd.xlane.f32.xlu0 %v555
          %v600 = vpop.xlane.xlu0 %599
          %601 = vadd.xlane.f32.xlu0 %v556
          %v602 = vpop.xlane.xlu0 %601
          %603 = vadd.xlane.f32.xlu0 %v557
          %v604 = vpop.xlane.xlu0 %603
          %605 = vadd.xlane.f32.xlu0 %v558
          %v606 = vpop.xlane.xlu0 %605
          %607 = vadd.xlane.f32.xlu0 %v559
          %v608 = vpop.xlane.xlu0 %607
          %609 = vadd.xlane.f32.xlu0 %v560
          %v610 = vpop.xlane.xlu0 %609
          %611 = vadd.xlane.f32.xlu0 %v561
          %v612 = vpop.xlane.xlu0 %611
          %613 = vadd.xlane.f32.xlu0 %v562
          %v614 = vpop.xlane.xlu0 %613
          %615 = vadd.xlane.f32.xlu0 %v563
          %v616 = vpop.xlane.xlu0 %615
          %617 = vadd.xlane.f32.xlu0 %v564
          %v618 = vpop.xlane.xlu0 %617
          %619 = vadd.xlane.f32.xlu0 %v565
          %v620 = vpop.xlane.xlu0 %619
          %621 = vadd.xlane.f32.xlu0 %v566
          %v622 = vpop.xlane.xlu0 %621
          %623 = vadd.xlane.f32.xlu0 %v567
          %v624 = vpop.xlane.xlu0 %623
          %625 = vadd.xlane.f32.xlu0 %v568
          %v626 = vpop.xlane.xlu0 %625
          %627 = vadd.xlane.f32.xlu0 %v569
          %v628 = vpop.xlane.xlu0 %627
          %629 = vadd.xlane.f32.xlu0 %v570
          %v630 = vpop.xlane.xlu0 %629
          %631 = vadd.xlane.f32.xlu0 %v571
          %v632 = vpop.xlane.xlu0 %631
          %633 = vadd.xlane.f32.xlu0 %v572
          %v634 = vpop.xlane.xlu0 %633
          %635 = vadd.xlane.f32.xlu0 %v573
          %v636 = vpop.xlane.xlu0 %635
          %637 = vadd.xlane.f32.xlu0 %v574
          %v638 = vpop.xlane.xlu0 %637
          %v639 = vmul.f32 %v576, %v478
          %v640 = vmul.f32 %v578, %v478
          %v641 = vmul.f32 %v580, %v478
          %v642 = vmul.f32 %v582, %v478
          %v643 = vmul.f32 %v584, %v478
          %v644 = vmul.f32 %v586, %v478
          %v645 = vmul.f32 %v588, %v478
          %v646 = vmul.f32 %v590, %v478
          %v647 = vmul.f32 %v592, %v478
          %v648 = vmul.f32 %v594, %v478
          %v649 = vmul.f32 %v596, %v478
          %v650 = vmul.f32 %v598, %v478
          %v651 = vmul.f32 %v600, %v478
          %v652 = vmul.f32 %v602, %v478
          %v653 = vmul.f32 %v604, %v478
          %v654 = vmul.f32 %v606, %v478
          %v655 = vmul.f32 %v608, %v478
          %v656 = vmul.f32 %v610, %v478
          %v657 = vmul.f32 %v612, %v478
          %v658 = vmul.f32 %v614, %v478
          %v659 = vmul.f32 %v616, %v478
          %v660 = vmul.f32 %v618, %v478
          %v661 = vmul.f32 %v620, %v478
          %v662 = vmul.f32 %v622, %v478
          %v663 = vmul.f32 %v624, %v478
          %v664 = vmul.f32 %v626, %v478
          %v665 = vmul.f32 %v628, %v478
          %v666 = vmul.f32 %v630, %v478
          %v667 = vmul.f32 %v632, %v478
          %v668 = vmul.f32 %v634, %v478
          %v669 = vmul.f32 %v636, %v478
          %v670 = vmul.f32 %v638, %v478
          %v671 = vadd.f32 %v639, 1e-05
          %v672 = vadd.f32 %v640, 1e-05
          %v673 = vadd.f32 %v641, 1e-05
          %v674 = vadd.f32 %v642, 1e-05
          %v675 = vadd.f32 %v643, 1e-05
          %v676 = vadd.f32 %v644, 1e-05
          %v677 = vadd.f32 %v645, 1e-05
          %v678 = vadd.f32 %v646, 1e-05
          %v679 = vadd.f32 %v647, 1e-05
          %v680 = vadd.f32 %v648, 1e-05
          %v681 = vadd.f32 %v649, 1e-05
          %v682 = vadd.f32 %v650, 1e-05
          %v683 = vadd.f32 %v651, 1e-05
          %v684 = vadd.f32 %v652, 1e-05
          %v685 = vadd.f32 %v653, 1e-05
          %v686 = vadd.f32 %v654, 1e-05
          %v687 = vadd.f32 %v655, 1e-05
          %v688 = vadd.f32 %v656, 1e-05
          %v689 = vadd.f32 %v657, 1e-05
          %v690 = vadd.f32 %v658, 1e-05
          %v691 = vadd.f32 %v659, 1e-05
          %v692 = vadd.f32 %v660, 1e-05
          %v693 = vadd.f32 %v661, 1e-05
          %v694 = vadd.f32 %v662, 1e-05
          %v695 = vadd.f32 %v663, 1e-05
          %v696 = vadd.f32 %v664, 1e-05
          %v697 = vadd.f32 %v665, 1e-05
          %v698 = vadd.f32 %v666, 1e-05
          %v699 = vadd.f32 %v667, 1e-05
          %v700 = vadd.f32 %v668, 1e-05
          %v701 = vadd.f32 %v669, 1e-05
          %v702 = vadd.f32 %v670, 1e-05
          %v703 = vrsqrt.pop %v671
          %v704 = vrsqrt.pop %v672
          %v705 = vrsqrt.pop %v673
          %v706 = vrsqrt.pop %v674
          %v707 = vrsqrt.pop %v675
          %v708 = vrsqrt.pop %v676
          %v709 = vrsqrt.pop %v677
          %v710 = vrsqrt.pop %v678
          %v711 = vrsqrt.pop %v679
          %v712 = vrsqrt.pop %v680
          %v713 = vrsqrt.pop %v681
          %v714 = vrsqrt.pop %v682
          %v715 = vrsqrt.pop %v683
          %v716 = vrsqrt.pop %v684
          %v717 = vrsqrt.pop %v685
          %v718 = vrsqrt.pop %v686
          %v719 = vrsqrt.pop %v687
          %v720 = vrsqrt.pop %v688
          %v721 = vrsqrt.pop %v689
          %v722 = vrsqrt.pop %v690
          %v723 = vrsqrt.pop %v691
          %v724 = vrsqrt.pop %v692
          %v725 = vrsqrt.pop %v693
          %v726 = vrsqrt.pop %v694
          %v727 = vrsqrt.pop %v695
          %v728 = vrsqrt.pop %v696
          %v729 = vrsqrt.pop %v697
          %v730 = vrsqrt.pop %v698
          %v731 = vrsqrt.pop %v699
          %v732 = vrsqrt.pop %v700
          %v733 = vrsqrt.pop %v701
          %v734 = vrsqrt.pop %v702
          %v735 = vmul.f32 %v511, %v703
          %v736 = vmul.f32 %v512, %v704
          %v737 = vmul.f32 %v513, %v705
          %v738 = vmul.f32 %v514, %v706
          %v739 = vmul.f32 %v515, %v707
          %v740 = vmul.f32 %v516, %v708
          %v741 = vmul.f32 %v517, %v709
          %v742 = vmul.f32 %v518, %v710
          %v743 = vmul.f32 %v519, %v711
          %v744 = vmul.f32 %v520, %v712
          %v745 = vmul.f32 %v521, %v713
          %v746 = vmul.f32 %v522, %v714
          %v747 = vmul.f32 %v523, %v715
          %v748 = vmul.f32 %v524, %v716
          %v749 = vmul.f32 %v525, %v717
          %v750 = vmul.f32 %v526, %v718
          %v751 = vmul.f32 %v527, %v719
          %v752 = vmul.f32 %v528, %v720
          %v753 = vmul.f32 %v529, %v721
          %v754 = vmul.f32 %v530, %v722
          %v755 = vmul.f32 %v531, %v723
          %v756 = vmul.f32 %v532, %v724
          %v757 = vmul.f32 %v533, %v725
          %v758 = vmul.f32 %v534, %v726
          %v759 = vmul.f32 %v535, %v727
          %v760 = vmul.f32 %v536, %v728
          %v761 = vmul.f32 %v537, %v729
          %v762 = vmul.f32 %v538, %v730
          %v763 = vmul.f32 %v539, %v731
          %v764 = vmul.f32 %v540, %v732
          %v765 = vmul.f32 %v541, %v733
          %v766 = vmul.f32 %v542, %v734
          %v767 = vld [vmem:[%s1] sm:$0x1]
          %v769 = vlaneseq
          %v770 = vshrl.u32 %v769, 7
          %v771 = vsub.s32 0, %v770
          %v772 = vrot.slane %v767, %v771
          %v774 = vmul.f32 %v735, %v772
          %v775 = vmul.f32 %v736, %v772
          %v776 = vmul.f32 %v737, %v772
          %v777 = vmul.f32 %v738, %v772
          %v778 = vmul.f32 %v739, %v772
          %v779 = vmul.f32 %v740, %v772
          %v780 = vmul.f32 %v741, %v772
          %v781 = vmul.f32 %v742, %v772
          %v782 = vmul.f32 %v743, %v772
          %v783 = vmul.f32 %v744, %v772
          %v784 = vmul.f32 %v745, %v772
          %v785 = vmul.f32 %v746, %v772
          %v786 = vmul.f32 %v747, %v772
          %v787 = vmul.f32 %v748, %v772
          %v788 = vmul.f32 %v749, %v772
          %v789 = vmul.f32 %v750, %v772
          %v790 = vmul.f32 %v751, %v772
          %v791 = vmul.f32 %v752, %v772
          %v792 = vmul.f32 %v753, %v772
          %v793 = vmul.f32 %v754, %v772
          %v794 = vmul.f32 %v755, %v772
          %v795 = vmul.f32 %v756, %v772
          %v796 = vmul.f32 %v757, %v772
          %v797 = vmul.f32 %v758, %v772
          %v798 = vmul.f32 %v759, %v772
          %v799 = vmul.f32 %v760, %v772
          %v800 = vmul.f32 %v761, %v772
          %v801 = vmul.f32 %v762, %v772
          %v802 = vmul.f32 %v763, %v772
          %v803 = vmul.f32 %v764, %v772
          %v804 = vmul.f32 %v765, %v772
          %v805 = vmul.f32 %v766, %v772
          %v806 = vld [vmem:[%s2] sm:$0x1]
          %v808 = vlaneseq
          %v809 = vshrl.u32 %v808, 7
          %v810 = vsub.s32 0, %v809
          %v811 = vrot.slane %v806, %v810
          %v813 = vadd.f32 %v774, %v811
          %v814 = vadd.f32 %v775, %v811
          %v815 = vadd.f32 %v776, %v811
          %v816 = vadd.f32 %v777, %v811
          %v817 = vadd.f32 %v778, %v811
          %v818 = vadd.f32 %v779, %v811
          %v819 = vadd.f32 %v780, %v811
          %v820 = vadd.f32 %v781, %v811
          %v821 = vadd.f32 %v782, %v811
          %v822 = vadd.f32 %v783, %v811
          %v823 = vadd.f32 %v784, %v811
          %v824 = vadd.f32 %v785, %v811
          %v825 = vadd.f32 %v786, %v811
          %v826 = vadd.f32 %v787, %v811
          %v827 = vadd.f32 %v788, %v811
          %v828 = vadd.f32 %v789, %v811
          %v829 = vadd.f32 %v790, %v811
          %v830 = vadd.f32 %v791, %v811
          %v831 = vadd.f32 %v792, %v811
          %v832 = vadd.f32 %v793, %v811
          %v833 = vadd.f32 %v794, %v811
          %v834 = vadd.f32 %v795, %v811
          %v835 = vadd.f32 %v796, %v811
          %v836 = vadd.f32 %v797, %v811
          %v837 = vadd.f32 %v798, %v811
          %v838 = vadd.f32 %v799, %v811
          %v839 = vadd.f32 %v800, %v811
          %v840 = vadd.f32 %v801, %v811
          %v841 = vadd.f32 %v802, %v811
          %v842 = vadd.f32 %v803, %v811
          %v843 = vadd.f32 %v804, %v811
          %v844 = vadd.f32 %v805, %v811
          %v845 = vpack.c.bf16 %v814, %v813
          %v846 = vpack.c.bf16 %v816, %v815
          %v847 = vpack.c.bf16 %v818, %v817
          %v848 = vpack.c.bf16 %v820, %v819
          %v849 = vpack.c.bf16 %v822, %v821
          %v850 = vpack.c.bf16 %v824, %v823
          %v851 = vpack.c.bf16 %v826, %v825
          %v852 = vpack.c.bf16 %v828, %v827
          %v853 = vpack.c.bf16 %v830, %v829
          %v854 = vpack.c.bf16 %v832, %v831
          %v855 = vpack.c.bf16 %v834, %v833
          %v856 = vpack.c.bf16 %v836, %v835
          %v857 = vpack.c.bf16 %v838, %v837
          %v858 = vpack.c.bf16 %v840, %v839
          %v859 = vpack.c.bf16 %v842, %v841
          %v860 = vpack.c.bf16 %v844, %v843
          %861 = vst [vmem:[#allocation2] sm:$0xff] %v845
          %862 = vst [vmem:[#allocation2 + $0x8] sm:$0xff] %v846
          %863 = vst [vmem:[#allocation2 + $0x10] sm:$0xff] %v847
          %864 = vst [vmem:[#allocation2 + $0x18] sm:$0xff] %v848
          %865 = vst [vmem:[#allocation2 + $0x20] sm:$0xff] %v849
          %866 = vst [vmem:[#allocation2 + $0x28] sm:$0xff] %v850
          %867 = vst [vmem:[#allocation2 + $0x30] sm:$0xff] %v851
          %868 = vst [vmem:[#allocation2 + $0x38] sm:$0xff] %v852
          %869 = vst [vmem:[#allocation2 + $0x40] sm:$0xff] %v853
          %870 = vst [vmem:[#allocation2 + $0x48] sm:$0xff] %v854
          %871 = vst [vmem:[#allocation2 + $0x50] sm:$0xff] %v855
          %872 = vst [vmem:[#allocation2 + $0x58] sm:$0xff] %v856
          %873 = vst [vmem:[#allocation2 + $0x60] sm:$0xff] %v857
          %874 = vst [vmem:[#allocation2 + $0x68] sm:$0xff] %v858
          %875 = vst [vmem:[#allocation2 + $0x70] sm:$0xff] %v859
          %876 = vst [vmem:[#allocation2 + $0x78] sm:$0xff] %v860
          %877 = vst [vmem:[#allocation3] sm:$0xff] 0.0
          %878 = vst [vmem:[#allocation3 + $0x8] sm:$0xff] 0.0
          %879 = vst [vmem:[#allocation3 + $0x10] sm:$0xff] 0.0
          %880 = vst [vmem:[#allocation3 + $0x18] sm:$0xff] 0.0
          %881 = vst [vmem:[#allocation3 + $0x20] sm:$0xff] 0.0
          %882 = vst [vmem:[#allocation3 + $0x28] sm:$0xff] 0.0
          %883 = vst [vmem:[#allocation3 + $0x30] sm:$0xff] 0.0
          %884 = vst [vmem:[#allocation3 + $0x38] sm:$0xff] 0.0
          %885 = vst [vmem:[#allocation3 + $0x40] sm:$0xff] 0.0
          %886 = vst [vmem:[#allocation3 + $0x48] sm:$0xff] 0.0
          %887 = vst [vmem:[#allocation3 + $0x50] sm:$0xff] 0.0
          %888 = vst [vmem:[#allocation3 + $0x58] sm:$0xff] 0.0
          %889 = vst [vmem:[#allocation3 + $0x60] sm:$0xff] 0.0
          %890 = vst [vmem:[#allocation3 + $0x68] sm:$0xff] 0.0
          %891 = vst [vmem:[#allocation3 + $0x70] sm:$0xff] 0.0
          %892 = vst [vmem:[#allocation3 + $0x78] sm:$0xff] 0.0
          %893 = vst [vmem:[#allocation3 + $0x80] sm:$0xff] 0.0
          %894 = vst [vmem:[#allocation3 + $0x88] sm:$0xff] 0.0
          %895 = vst [vmem:[#allocation3 + $0x90] sm:$0xff] 0.0
          %896 = vst [vmem:[#allocation3 + $0x98] sm:$0xff] 0.0
          %897 = vst [vmem:[#allocation3 + $0xa0] sm:$0xff] 0.0
          %898 = vst [vmem:[#allocation3 + $0xa8] sm:$0xff] 0.0
          %899 = vst [vmem:[#allocation3 + $0xb0] sm:$0xff] 0.0
          %900 = vst [vmem:[#allocation3 + $0xb8] sm:$0xff] 0.0
          %901 = vst [vmem:[#allocation3 + $0xc0] sm:$0xff] 0.0
          %902 = vst [vmem:[#allocation3 + $0xc8] sm:$0xff] 0.0
          %903 = vst [vmem:[#allocation3 + $0xd0] sm:$0xff] 0.0
          %904 = vst [vmem:[#allocation3 + $0xd8] sm:$0xff] 0.0
          %905 = vst [vmem:[#allocation3 + $0xe0] sm:$0xff] 0.0
          %906 = vst [vmem:[#allocation3 + $0xe8] sm:$0xff] 0.0
          %907 = vst [vmem:[#allocation3 + $0xf0] sm:$0xff] 0.0
          %908 = vst [vmem:[#allocation3 + $0xf8] sm:$0xff] 0.0
        $region64: #{tpu_custom_call.1} parent=47 // pred_fallthru
          _
        %v909 = vld [vmem:[#allocation2] sm:$0xff]
        %v910 = vld [vmem:[#allocation2 + $0x8] sm:$0xff]
        %v911 = vld [vmem:[#allocation2 + $0x10] sm:$0xff]
        %v912 = vld [vmem:[#allocation2 + $0x18] sm:$0xff]
        %v913 = vld [vmem:[#allocation2 + $0x20] sm:$0xff]
        %v914 = vld [vmem:[#allocation2 + $0x28] sm:$0xff]
        %v915 = vld [vmem:[#allocation2 + $0x30] sm:$0xff]
        %v916 = vld [vmem:[#allocation2 + $0x38] sm:$0xff]
        %v917 = vld [vmem:[#allocation2 + $0x40] sm:$0xff]
        %v918 = vld [vmem:[#allocation2 + $0x48] sm:$0xff]
        %v919 = vld [vmem:[#allocation2 + $0x50] sm:$0xff]
        %v920 = vld [vmem:[#allocation2 + $0x58] sm:$0xff]
        %v921 = vld [vmem:[#allocation2 + $0x60] sm:$0xff]
        %v922 = vld [vmem:[#allocation2 + $0x68] sm:$0xff]
        %v923 = vld [vmem:[#allocation2 + $0x70] sm:$0xff]
        %v924 = vld [vmem:[#allocation2 + $0x78] sm:$0xff]
        %v925 = vld [vmem:[#allocation7] sm:$0xff]
        %v926 = vld [vmem:[#allocation7 + $0x8] sm:$0xff]
        %v927 = vld [vmem:[#allocation7 + $0x10] sm:$0xff]
        %v928 = vld [vmem:[#allocation7 + $0x18] sm:$0xff]
        %v929 = vld [vmem:[#allocation7 + $0x20] sm:$0xff]
        %v930 = vld [vmem:[#allocation7 + $0x28] sm:$0xff]
        %v931 = vld [vmem:[#allocation7 + $0x30] sm:$0xff]
        %v932 = vld [vmem:[#allocation7 + $0x38] sm:$0xff]
        %v933 = vld [vmem:[#allocation7 + $0x40] sm:$0xff]
        %v934 = vld [vmem:[#allocation7 + $0x48] sm:$0xff]
        %v935 = vld [vmem:[#allocation7 + $0x50] sm:$0xff]
        %v936 = vld [vmem:[#allocation7 + $0x58] sm:$0xff]
        %v937 = vld [vmem:[#allocation7 + $0x60] sm:$0xff]
        %v938 = vld [vmem:[#allocation7 + $0x68] sm:$0xff]
        %v939 = vld [vmem:[#allocation7 + $0x70] sm:$0xff]
        %v940 = vld [vmem:[#allocation7 + $0x78] sm:$0xff]
        %v941 = vld [vmem:[%s373] sm:$0x3]
        %v943 = vlaneseq
        %v944 = vshrl.u32 %v943, 7
        %v945 = vsub.s32 0, %v944
        %v946 = vrot.slane %v941, %v945
        %v947 = vlaneseq
        %v948 = vshrl.u32 %v947, 7
        %v949 = vsub.s32 1, %v948
        %v950 = vrot.slane %v941, %v949
        %v969 = vunpack.c.l.b16 %v925
        %v970 = vunpack.c.h.b16 %v925
        %v971 = vunpack.c.l.b16 %v926
        %v972 = vunpack.c.h.b16 %v926
        %v973 = vunpack.c.l.b16 %v927
        %v974 = vunpack.c.h.b16 %v927
        %v975 = vunpack.c.l.b16 %v928
        %v976 = vunpack.c.h.b16 %v928
        %v977 = vunpack.c.l.b16 %v929
        %v978 = vunpack.c.h.b16 %v929
        %v979 = vunpack.c.l.b16 %v930
        %v980 = vunpack.c.h.b16 %v930
        %v981 = vunpack.c.l.b16 %v931
        %v982 = vunpack.c.h.b16 %v931
        %v983 = vunpack.c.l.b16 %v932
        %v984 = vunpack.c.h.b16 %v932
        %v985 = vunpack.c.l.b16 %v933
        %v986 = vunpack.c.h.b16 %v933
        %v987 = vunpack.c.l.b16 %v934
        %v988 = vunpack.c.h.b16 %v934
        %v989 = vunpack.c.l.b16 %v935
        %v990 = vunpack.c.h.b16 %v935
        %v991 = vunpack.c.l.b16 %v936
        %v992 = vunpack.c.h.b16 %v936
        %v993 = vunpack.c.l.b16 %v937
        %v994 = vunpack.c.h.b16 %v937
        %v995 = vunpack.c.l.b16 %v938
        %v996 = vunpack.c.h.b16 %v938
        %v997 = vunpack.c.l.b16 %v939
        %v998 = vunpack.c.h.b16 %v939
        %v999 = vunpack.c.l.b16 %v940
        %v1000 = vunpack.c.h.b16 %v940
        %v1001 = vpack.c.b16 %v971, %v969
        %v1002 = vpack.c.b16 %v972, %v970
        %v1003 = vpack.c.b16 %v975, %v973
        %v1004 = vpack.c.b16 %v976, %v974
        %v1005 = vpack.c.b16 %v979, %v977
        %v1006 = vpack.c.b16 %v980, %v978
        %v1007 = vpack.c.b16 %v983, %v981
        %v1008 = vpack.c.b16 %v984, %v982
        %v1009 = vpack.c.b16 %v987, %v985
        %v1010 = vpack.c.b16 %v988, %v986
        %v1011 = vpack.c.b16 %v991, %v989
        %v1012 = vpack.c.b16 %v992, %v990
        %v1013 = vpack.c.b16 %v995, %v993
        %v1014 = vpack.c.b16 %v996, %v994
        %v1015 = vpack.c.b16 %v999, %v997
        %v1016 = vpack.c.b16 %v1000, %v998
        %1033 = vmatprep.subr.bf16.mxu0 %v1002
        %1034 = vmatpush1.bf16.msra.mxu0 %v1001
        %1035 = vmatprep.subr.bf16.mxu0 %v1004
        %1036 = vmatpush1.bf16.msra.mxu0 %v1003
        %1037 = vmatprep.subr.bf16.mxu0 %v1006
        %1038 = vmatpush1.bf16.msra.mxu0 %v1005
        %1039 = vmatprep.subr.bf16.mxu0 %v1008
        %1040 = vmatpush1.bf16.msra.mxu0 %v1007
        %1041 = vmatprep.subr.bf16.mxu0 %v1010
        %1042 = vmatpush1.bf16.msra.mxu0 %v1009
        %1043 = vmatprep.subr.bf16.mxu0 %v1012
        %1044 = vmatpush1.bf16.msra.mxu0 %v1011
        %1045 = vmatprep.subr.bf16.mxu0 %v1014
        %1046 = vmatpush1.bf16.msra.mxu0 %v1013
        %1047 = vmatprep.subr.bf16.mxu0 %v1016
        %1048 = vmatpush1.bf16.msra.mxu0 %v1015
        %1049 = vmatprep.subr.bf16.mxu0 0
        %1050 = vmatpush1.bf16.msra.mxu0 0
        %1051 = vmatprep.subr.bf16.mxu0 0
        %1052 = vmatpush1.bf16.msra.mxu0 0
        %1053 = vmatprep.subr.bf16.mxu0 0
        %1054 = vmatpush1.bf16.msra.mxu0 0
        %1055 = vmatprep.subr.bf16.mxu0 0
        %1056 = vmatpush1.bf16.msra.mxu0 0
        %1057 = vmatprep.subr.bf16.mxu0 0
        %1058 = vmatpush1.bf16.msra.mxu0 0
        %1059 = vmatprep.subr.bf16.mxu0 0
        %1060 = vmatpush1.bf16.msra.mxu0 0
        %1061 = vmatprep.subr.bf16.mxu0 0
        %1062 = vmatpush1.bf16.msra.mxu0 0
        %1063 = vmatprep.subr.bf16.mxu0 0
        %1064 = vmatpush1.bf16.msra.mxu0 0
        %1065 = vmatprep.mubr.bf16.mxu0 0
        %1066 = vmatmul.mubr.bf16.gmra.mrb[0].mxu0 %v909
        %v1067 = vpop.f32.mrb[0].mxu0
        %v1068 = vadd.f32 %v946, %v1067
        %v1069 = vpop.f32.mrb[0].mxu0
        %v1070 = vadd.f32 %v950, %v1069
        %v1071 = vpop.f32.mrb[0].mxu0
        %v1072 = vadd.f32 %v946, %v1071
        %v1073 = vpop.f32.mrb[0].mxu0
        %v1074 = vadd.f32 %v950, %v1073
        %1075 = vmatprep.mubr.bf16.mxu0 0
        %1076 = vmatmul.mubr.bf16.gmra.mrb[0].mxu0 %v910
        %v1077 = vpop.f32.mrb[0].mxu0
        %v1078 = vadd.f32 %v946, %v1077
        %v1079 = vpop.f32.mrb[0].mxu0
        %v1080 = vadd.f32 %v950, %v1079
        %v1081 = vpop.f32.mrb[0].mxu0
        %v1082 = vadd.f32 %v946, %v1081
        %v1083 = vpop.f32.mrb[0].mxu0
        %v1084 = vadd.f32 %v950, %v1083
        %1085 = vmatprep.mubr.bf16.mxu0 0
        %1086 = vmatmul.mubr.bf16.gmra.mrb[0].mxu0 %v911
        %v1087 = vpop.f32.mrb[0].mxu0
        %v1088 = vadd.f32 %v946, %v1087
        %v1089 = vpop.f32.mrb[0].mxu0
        %v1090 = vadd.f32 %v950, %v1089
        %v1091 = vpop.f32.mrb[0].mxu0
        %v1092 = vadd.f32 %v946, %v1091
        %v1093 = vpop.f32.mrb[0].mxu0
        %v1094 = vadd.f32 %v950, %v1093
        %1095 = vmatprep.mubr.bf16.mxu0 0
        %1096 = vmatmul.mubr.bf16.gmra.mrb[0].mxu0 %v912
        %v1097 = vpop.f32.mrb[0].mxu0
        %v1098 = vadd.f32 %v946, %v1097
        %v1099 = vpop.f32.mrb[0].mxu0
        %v1100 = vadd.f32 %v950, %v1099
        %v1101 = vpop.f32.mrb[0].mxu0
        %v1102 = vadd.f32 %v946, %v1101
        %v1103 = vpop.f32.mrb[0].mxu0
        %v1104 = vadd.f32 %v950, %v1103
        %1105 = vmatprep.mubr.bf16.mxu0 0
        %1106 = vmatmul.mubr.bf16.gmra.mrb[0].mxu0 %v913
        %v1107 = vpop.f32.mrb[0].mxu0
        %v1108 = vadd.f32 %v946, %v1107
        %v1109 = vpop.f32.mrb[0].mxu0
        %v1110 = vadd.f32 %v950, %v1109
        %v1111 = vpop.f32.mrb[0].mxu0
        %v1112 = vadd.f32 %v946, %v1111
        %v1113 = vpop.f32.mrb[0].mxu0
        %v1114 = vadd.f32 %v950, %v1113
        %1115 = vmatprep.mubr.bf16.mxu0 0
        %1116 = vmatmul.mubr.bf16.gmra.mrb[0].mxu0 %v914
        %v1117 = vpop.f32.mrb[0].mxu0
        %v1118 = vadd.f32 %v946, %v1117
        %v1119 = vpop.f32.mrb[0].mxu0
        %v1120 = vadd.f32 %v950, %v1119
        %v1121 = vpop.f32.mrb[0].mxu0
        %v1122 = vadd.f32 %v946, %v1121
        %v1123 = vpop.f32.mrb[0].mxu0
        %v1124 = vadd.f32 %v950, %v1123
        %1125 = vmatprep.mubr.bf16.mxu0 0
        %1126 = vmatmul.mubr.bf16.gmra.mrb[0].mxu0 %v915
        %v1127 = vpop.f32.mrb[0].mxu0
        %v1128 = vadd.f32 %v946, %v1127
        %v1129 = vpop.f32.mrb[0].mxu0
        %v1130 = vadd.f32 %v950, %v1129
        %v1131 = vpop.f32.mrb[0].mxu0
        %v1132 = vadd.f32 %v946, %v1131
        %v1133 = vpop.f32.mrb[0].mxu0
        %v1134 = vadd.f32 %v950, %v1133
        %1135 = vmatprep.mubr.bf16.mxu0 0
        %1136 = vmatmul.mubr.bf16.gmra.mrb[0].mxu0 %v916
        %v1137 = vpop.f32.mrb[0].mxu0
        %v1138 = vadd.f32 %v946, %v1137
        %v1139 = vpop.f32.mrb[0].mxu0
        %v1140 = vadd.f32 %v950, %v1139
        %v1141 = vpop.f32.mrb[0].mxu0
        %v1142 = vadd.f32 %v946, %v1141
        %v1143 = vpop.f32.mrb[0].mxu0
        %v1144 = vadd.f32 %v950, %v1143
        %1145 = vmatprep.mubr.bf16.mxu0 0
        %1146 = vmatmul.mubr.bf16.gmra.mrb[0].mxu0 %v917
        %v1147 = vpop.f32.mrb[0].mxu0
        %v1148 = vadd.f32 %v946, %v1147
        %v1149 = vpop.f32.mrb[0].mxu0
        %v1150 = vadd.f32 %v950, %v1149
        %v1151 = vpop.f32.mrb[0].mxu0
        %v1152 = vadd.f32 %v946, %v1151
        %v1153 = vpop.f32.mrb[0].mxu0
        %v1154 = vadd.f32 %v950, %v1153
        %1155 = vmatprep.mubr.bf16.mxu0 0
        %1156 = vmatmul.mubr.bf16.gmra.mrb[0].mxu0 %v918
        %v1157 = vpop.f32.mrb[0].mxu0
        %v1158 = vadd.f32 %v946, %v1157
        %v1159 = vpop.f32.mrb[0].mxu0
        %v1160 = vadd.f32 %v950, %v1159
        %v1161 = vpop.f32.mrb[0].mxu0
        %v1162 = vadd.f32 %v946, %v1161
        %v1163 = vpop.f32.mrb[0].mxu0
        %v1164 = vadd.f32 %v950, %v1163
        %1165 = vmatprep.mubr.bf16.mxu0 0
        %1166 = vmatmul.mubr.bf16.gmra.mrb[0].mxu0 %v919
        %v1167 = vpop.f32.mrb[0].mxu0
        %v1168 = vadd.f32 %v946, %v1167
        %v1169 = vpop.f32.mrb[0].mxu0
        %v1170 = vadd.f32 %v950, %v1169
        %v1171 = vpop.f32.mrb[0].mxu0
        %v1172 = vadd.f32 %v946, %v1171
        %v1173 = vpop.f32.mrb[0].mxu0
        %v1174 = vadd.f32 %v950, %v1173
        %1175 = vmatprep.mubr.bf16.mxu0 0
        %1176 = vmatmul.mubr.bf16.gmra.mrb[0].mxu0 %v920
        %v1177 = vpop.f32.mrb[0].mxu0
        %v1178 = vadd.f32 %v946, %v1177
        %v1179 = vpop.f32.mrb[0].mxu0
        %v1180 = vadd.f32 %v950, %v1179
        %v1181 = vpop.f32.mrb[0].mxu0
        %v1182 = vadd.f32 %v946, %v1181
        %v1183 = vpop.f32.mrb[0].mxu0
        %v1184 = vadd.f32 %v950, %v1183
        %1185 = vmatprep.mubr.bf16.mxu0 0
        %1186 = vmatmul.mubr.bf16.gmra.mrb[0].mxu0 %v921
        %v1187 = vpop.f32.mrb[0].mxu0
        %v1188 = vadd.f32 %v946, %v1187
        %v1189 = vpop.f32.mrb[0].mxu0
        %v1190 = vadd.f32 %v950, %v1189
        %v1191 = vpop.f32.mrb[0].mxu0
        %v1192 = vadd.f32 %v946, %v1191
        %v1193 = vpop.f32.mrb[0].mxu0
        %v1194 = vadd.f32 %v950, %v1193
        %1195 = vmatprep.mubr.bf16.mxu0 0
        %1196 = vmatmul.mubr.bf16.gmra.mrb[0].mxu0 %v922
        %v1197 = vpop.f32.mrb[0].mxu0
        %v1198 = vadd.f32 %v946, %v1197
        %v1199 = vpop.f32.mrb[0].mxu0
        %v1200 = vadd.f32 %v950, %v1199
        %v1201 = vpop.f32.mrb[0].mxu0
        %v1202 = vadd.f32 %v946, %v1201
        %v1203 = vpop.f32.mrb[0].mxu0
        %v1204 = vadd.f32 %v950, %v1203
        %1205 = vmatprep.mubr.bf16.mxu0 0
        %1206 = vmatmul.mubr.bf16.gmra.mrb[0].mxu0 %v923
        %v1207 = vpop.f32.mrb[0].mxu0
        %v1208 = vadd.f32 %v946, %v1207
        %v1209 = vpop.f32.mrb[0].mxu0
        %v1210 = vadd.f32 %v950, %v1209
        %v1211 = vpop.f32.mrb[0].mxu0
        %v1212 = vadd.f32 %v946, %v1211
        %v1213 = vpop.f32.mrb[0].mxu0
        %v1214 = vadd.f32 %v950, %v1213
        %1215 = vmatprep.mubr.bf16.mxu0 0
        %1216 = vmatmul.mubr.bf16.gmra.mrb[0].mxu0 %v924
        %v1217 = vpop.f32.mrb[0].mxu0
        %v1218 = vadd.f32 %v946, %v1217
        %v1219 = vpop.f32.mrb[0].mxu0
        %v1220 = vadd.f32 %v950, %v1219
        %v1221 = vpop.f32.mrb[0].mxu0
        %v1222 = vadd.f32 %v946, %v1221
        %v1223 = vpop.f32.mrb[0].mxu0
        %v1224 = vadd.f32 %v950, %v1223
        %1225 = vdwg.mxu0
        %v1226 = vmul.f32 %v1068, %v1068
        %v1227 = vmul.f32 %v1070, %v1070
        %v1228 = vmul.f32 %v1072, %v1072
        %v1229 = vmul.f32 %v1074, %v1074
        %v1230 = vmul.f32 %v1078, %v1078
        %v1231 = vmul.f32 %v1080, %v1080
        %v1232 = vmul.f32 %v1082, %v1082
        %v1233 = vmul.f32 %v1084, %v1084
        %v1234 = vmul.f32 %v1088, %v1088
        %v1235 = vmul.f32 %v1090, %v1090
        %v1236 = vmul.f32 %v1092, %v1092
        %v1237 = vmul.f32 %v1094, %v1094
        %v1238 = vmul.f32 %v1098, %v1098
        %v1239 = vmul.f32 %v1100, %v1100
        %v1240 = vmul.f32 %v1102, %v1102
        %v1241 = vmul.f32 %v1104, %v1104
        %v1242 = vmul.f32 %v1108, %v1108
        %v1243 = vmul.f32 %v1110, %v1110
        %v1244 = vmul.f32 %v1112, %v1112
        %v1245 = vmul.f32 %v1114, %v1114
        %v1246 = vmul.f32 %v1118, %v1118
        %v1247 = vmul.f32 %v1120, %v1120
        %v1248 = vmul.f32 %v1122, %v1122
        %v1249 = vmul.f32 %v1124, %v1124
        %v1250 = vmul.f32 %v1128, %v1128
        %v1251 = vmul.f32 %v1130, %v1130
        %v1252 = vmul.f32 %v1132, %v1132
        %v1253 = vmul.f32 %v1134, %v1134
        %v1254 = vmul.f32 %v1138, %v1138
        %v1255 = vmul.f32 %v1140, %v1140
        %v1256 = vmul.f32 %v1142, %v1142
        %v1257 = vmul.f32 %v1144, %v1144
        %v1258 = vmul.f32 %v1148, %v1148
        %v1259 = vmul.f32 %v1150, %v1150
        %v1260 = vmul.f32 %v1152, %v1152
        %v1261 = vmul.f32 %v1154, %v1154
        %v1262 = vmul.f32 %v1158, %v1158
        %v1263 = vmul.f32 %v1160, %v1160
        %v1264 = vmul.f32 %v1162, %v1162
        %v1265 = vmul.f32 %v1164, %v1164
        %v1266 = vmul.f32 %v1168, %v1168
        %v1267 = vmul.f32 %v1170, %v1170
        %v1268 = vmul.f32 %v1172, %v1172
        %v1269 = vmul.f32 %v1174, %v1174
        %v1270 = vmul.f32 %v1178, %v1178
        %v1271 = vmul.f32 %v1180, %v1180
        %v1272 = vmul.f32 %v1182, %v1182
        %v1273 = vmul.f32 %v1184, %v1184
        %v1274 = vmul.f32 %v1188, %v1188
        %v1275 = vmul.f32 %v1190, %v1190
        %v1276 = vmul.f32 %v1192, %v1192
        %v1277 = vmul.f32 %v1194, %v1194
        %v1278 = vmul.f32 %v1198, %v1198
        %v1279 = vmul.f32 %v1200, %v1200
        %v1280 = vmul.f32 %v1202, %v1202
        %v1281 = vmul.f32 %v1204, %v1204
        %v1282 = vmul.f32 %v1208, %v1208
        %v1283 = vmul.f32 %v1210, %v1210
        %v1284 = vmul.f32 %v1212, %v1212
        %v1285 = vmul.f32 %v1214, %v1214
        %v1286 = vmul.f32 %v1218, %v1218
        %v1287 = vmul.f32 %v1220, %v1220
        %v1288 = vmul.f32 %v1222, %v1222
        %v1289 = vmul.f32 %v1224, %v1224
        %v1290 = vmul.f32 %v1068, %v1226
        %v1291 = vmul.f32 %v1070, %v1227
        %v1292 = vmul.f32 %v1072, %v1228
        %v1293 = vmul.f32 %v1074, %v1229
        %v1294 = vmul.f32 %v1078, %v1230
        %v1295 = vmul.f32 %v1080, %v1231
        %v1296 = vmul.f32 %v1082, %v1232
        %v1297 = vmul.f32 %v1084, %v1233
        %v1298 = vmul.f32 %v1088, %v1234
        %v1299 = vmul.f32 %v1090, %v1235
        %v1300 = vmul.f32 %v1092, %v1236
        %v1301 = vmul.f32 %v1094, %v1237
        %v1302 = vmul.f32 %v1098, %v1238
        %v1303 = vmul.f32 %v1100, %v1239
        %v1304 = vmul.f32 %v1102, %v1240
        %v1305 = vmul.f32 %v1104, %v1241
        %v1306 = vmul.f32 %v1108, %v1242
        %v1307 = vmul.f32 %v1110, %v1243
        %v1308 = vmul.f32 %v1112, %v1244
        %v1309 = vmul.f32 %v1114, %v1245
        %v1310 = vmul.f32 %v1118, %v1246
        %v1311 = vmul.f32 %v1120, %v1247
        %v1312 = vmul.f32 %v1122, %v1248
        %v1313 = vmul.f32 %v1124, %v1249
        %v1314 = vmul.f32 %v1128, %v1250
        %v1315 = vmul.f32 %v1130, %v1251
        %v1316 = vmul.f32 %v1132, %v1252
        %v1317 = vmul.f32 %v1134, %v1253
        %v1318 = vmul.f32 %v1138, %v1254
        %v1319 = vmul.f32 %v1140, %v1255
        %v1320 = vmul.f32 %v1142, %v1256
        %v1321 = vmul.f32 %v1144, %v1257
        %v1322 = vmul.f32 %v1148, %v1258
        %v1323 = vmul.f32 %v1150, %v1259
        %v1324 = vmul.f32 %v1152, %v1260
        %v1325 = vmul.f32 %v1154, %v1261
        %v1326 = vmul.f32 %v1158, %v1262
        %v1327 = vmul.f32 %v1160, %v1263
        %v1328 = vmul.f32 %v1162, %v1264
        %v1329 = vmul.f32 %v1164, %v1265
        %v1330 = vmul.f32 %v1168, %v1266
        %v1331 = vmul.f32 %v1170, %v1267
        %v1332 = vmul.f32 %v1172, %v1268
        %v1333 = vmul.f32 %v1174, %v1269
        %v1334 = vmul.f32 %v1178, %v1270
        %v1335 = vmul.f32 %v1180, %v1271
        %v1336 = vmul.f32 %v1182, %v1272
        %v1337 = vmul.f32 %v1184, %v1273
        %v1338 = vmul.f32 %v1188, %v1274
        %v1339 = vmul.f32 %v1190, %v1275
        %v1340 = vmul.f32 %v1192, %v1276
        %v1341 = vmul.f32 %v1194, %v1277
        %v1342 = vmul.f32 %v1198, %v1278
        %v1343 = vmul.f32 %v1200, %v1279
        %v1344 = vmul.f32 %v1202, %v1280
        %v1345 = vmul.f32 %v1204, %v1281
        %v1346 = vmul.f32 %v1208, %v1282
        %v1347 = vmul.f32 %v1210, %v1283
        %v1348 = vmul.f32 %v1212, %v1284
        %v1349 = vmul.f32 %v1214, %v1285
        %v1350 = vmul.f32 %v1218, %v1286
        %v1351 = vmul.f32 %v1220, %v1287
        %v1352 = vmul.f32 %v1222, %v1288
        %v1353 = vmul.f32 %v1224, %v1289
        %v1354 = vmul.f32 %v1290, 0.044715
        %v1355 = vmul.f32 %v1291, 0.044715
        %v1356 = vmul.f32 %v1292, 0.044715
        %v1357 = vmul.f32 %v1293, 0.044715
        %v1358 = vmul.f32 %v1294, 0.044715
        %v1359 = vmul.f32 %v1295, 0.044715
        %v1360 = vmul.f32 %v1296, 0.044715
        %v1361 = vmul.f32 %v1297, 0.044715
        %v1362 = vmul.f32 %v1298, 0.044715
        %v1363 = vmul.f32 %v1299, 0.044715
        %v1364 = vmul.f32 %v1300, 0.044715
        %v1365 = vmul.f32 %v1301, 0.044715
        %v1366 = vmul.f32 %v1302, 0.044715
        %v1367 = vmul.f32 %v1303, 0.044715
        %v1368 = vmul.f32 %v1304, 0.044715
        %v1369 = vmul.f32 %v1305, 0.044715
        %v1370 = vmul.f32 %v1306, 0.044715
        %v1371 = vmul.f32 %v1307, 0.044715
        %v1372 = vmul.f32 %v1308, 0.044715
        %v1373 = vmul.f32 %v1309, 0.044715
        %v1374 = vmul.f32 %v1310, 0.044715
        %v1375 = vmul.f32 %v1311, 0.044715
        %v1376 = vmul.f32 %v1312, 0.044715
        %v1377 = vmul.f32 %v1313, 0.044715
        %v1378 = vmul.f32 %v1314, 0.044715
        %v1379 = vmul.f32 %v1315, 0.044715
        %v1380 = vmul.f32 %v1316, 0.044715
        %v1381 = vmul.f32 %v1317, 0.044715
        %v1382 = vmul.f32 %v1318, 0.044715
        %v1383 = vmul.f32 %v1319, 0.044715
        %v1384 = vmul.f32 %v1320, 0.044715
        %v1385 = vmul.f32 %v1321, 0.044715
        %v1386 = vmul.f32 %v1322, 0.044715
        %v1387 = vmul.f32 %v1323, 0.044715
        %v1388 = vmul.f32 %v1324, 0.044715
        %v1389 = vmul.f32 %v1325, 0.044715
        %v1390 = vmul.f32 %v1326, 0.044715
        %v1391 = vmul.f32 %v1327, 0.044715
        %v1392 = vmul.f32 %v1328, 0.044715
        %v1393 = vmul.f32 %v1329, 0.044715
        %v1394 = vmul.f32 %v1330, 0.044715
        %v1395 = vmul.f32 %v1331, 0.044715
        %v1396 = vmul.f32 %v1332, 0.044715
        %v1397 = vmul.f32 %v1333, 0.044715
        %v1398 = vmul.f32 %v1334, 0.044715
        %v1399 = vmul.f32 %v1335, 0.044715
        %v1400 = vmul.f32 %v1336, 0.044715
        %v1401 = vmul.f32 %v1337, 0.044715
        %v1402 = vmul.f32 %v1338, 0.044715
        %v1403 = vmul.f32 %v1339, 0.044715
        %v1404 = vmul.f32 %v1340, 0.044715
        %v1405 = vmul.f32 %v1341, 0.044715
        %v1406 = vmul.f32 %v1342, 0.044715
        %v1407 = vmul.f32 %v1343, 0.044715
        %v1408 = vmul.f32 %v1344, 0.044715
        %v1409 = vmul.f32 %v1345, 0.044715
        %v1410 = vmul.f32 %v1346, 0.044715
        %v1411 = vmul.f32 %v1347, 0.044715
        %v1412 = vmul.f32 %v1348, 0.044715
        %v1413 = vmul.f32 %v1349, 0.044715
        %v1414 = vmul.f32 %v1350, 0.044715
        %v1415 = vmul.f32 %v1351, 0.044715
        %v1416 = vmul.f32 %v1352, 0.044715
        %v1417 = vmul.f32 %v1353, 0.044715
        %v1418 = vadd.f32 %v1068, %v1354
        %v1419 = vadd.f32 %v1070, %v1355
        %v1420 = vadd.f32 %v1072, %v1356
        %v1421 = vadd.f32 %v1074, %v1357
        %v1422 = vadd.f32 %v1078, %v1358
        %v1423 = vadd.f32 %v1080, %v1359
        %v1424 = vadd.f32 %v1082, %v1360
        %v1425 = vadd.f32 %v1084, %v1361
        %v1426 = vadd.f32 %v1088, %v1362
        %v1427 = vadd.f32 %v1090, %v1363
        %v1428 = vadd.f32 %v1092, %v1364
        %v1429 = vadd.f32 %v1094, %v1365
        %v1430 = vadd.f32 %v1098, %v1366
        %v1431 = vadd.f32 %v1100, %v1367
        %v1432 = vadd.f32 %v1102, %v1368
        %v1433 = vadd.f32 %v1104, %v1369
        %v1434 = vadd.f32 %v1108, %v1370
        %v1435 = vadd.f32 %v1110, %v1371
        %v1436 = vadd.f32 %v1112, %v1372
        %v1437 = vadd.f32 %v1114, %v1373
        %v1438 = vadd.f32 %v1118, %v1374
        %v1439 = vadd.f32 %v1120, %v1375
        %v1440 = vadd.f32 %v1122, %v1376
        %v1441 = vadd.f32 %v1124, %v1377
        %v1442 = vadd.f32 %v1128, %v1378
        %v1443 = vadd.f32 %v1130, %v1379
        %v1444 = vadd.f32 %v1132, %v1380
        %v1445 = vadd.f32 %v1134, %v1381
        %v1446 = vadd.f32 %v1138, %v1382
        %v1447 = vadd.f32 %v1140, %v1383
        %v1448 = vadd.f32 %v1142, %v1384
        %v1449 = vadd.f32 %v1144, %v1385
        %v1450 = vadd.f32 %v1148, %v1386
        %v1451 = vadd.f32 %v1150, %v1387
        %v1452 = vadd.f32 %v1152, %v1388
        %v1453 = vadd.f32 %v1154, %v1389
        %v1454 = vadd.f32 %v1158, %v1390
        %v1455 = vadd.f32 %v1160, %v1391
        %v1456 = vadd.f32 %v1162, %v1392
        %v1457 = vadd.f32 %v1164, %v1393
        %v1458 = vadd.f32 %v1168, %v1394
        %v1459 = vadd.f32 %v1170, %v1395
        %v1460 = vadd.f32 %v1172, %v1396
        %v1461 = vadd.f32 %v1174, %v1397
        %v1462 = vadd.f32 %v1178, %v1398
        %v1463 = vadd.f32 %v1180, %v1399
        %v1464 = vadd.f32 %v1182, %v1400
        %v1465 = vadd.f32 %v1184, %v1401
        %v1466 = vadd.f32 %v1188, %v1402
        %v1467 = vadd.f32 %v1190, %v1403
        %v1468 = vadd.f32 %v1192, %v1404
        %v1469 = vadd.f32 %v1194, %v1405
        %v1470 = vadd.f32 %v1198, %v1406
        %v1471 = vadd.f32 %v1200, %v1407
        %v1472 = vadd.f32 %v1202, %v1408
        %v1473 = vadd.f32 %v1204, %v1409
        %v1474 = vadd.f32 %v1208, %v1410
        %v1475 = vadd.f32 %v1210, %v1411
        %v1476 = vadd.f32 %v1212, %v1412
        %v1477 = vadd.f32 %v1214, %v1413
        %v1478 = vadd.f32 %v1218, %v1414
        %v1479 = vadd.f32 %v1220, %v1415
        %v1480 = vadd.f32 %v1222, %v1416
        %v1481 = vadd.f32 %v1224, %v1417
        %v1482 = vmul.f32 %v1418, 0.7978846
        %v1483 = vmul.f32 %v1419, 0.7978846
        %v1484 = vmul.f32 %v1420, 0.7978846
        %v1485 = vmul.f32 %v1421, 0.7978846
        %v1486 = vmul.f32 %v1422, 0.7978846
        %v1487 = vmul.f32 %v1423, 0.7978846
        %v1488 = vmul.f32 %v1424, 0.7978846
        %v1489 = vmul.f32 %v1425, 0.7978846
        %v1490 = vmul.f32 %v1426, 0.7978846
        %v1491 = vmul.f32 %v1427, 0.7978846
        %v1492 = vmul.f32 %v1428, 0.7978846
        %v1493 = vmul.f32 %v1429, 0.7978846
        %v1494 = vmul.f32 %v1430, 0.7978846
        %v1495 = vmul.f32 %v1431, 0.7978846
        %v1496 = vmul.f32 %v1432, 0.7978846
        %v1497 = vmul.f32 %v1433, 0.7978846
        %v1498 = vmul.f32 %v1434, 0.7978846
        %v1499 = vmul.f32 %v1435, 0.7978846
        %v1500 = vmul.f32 %v1436, 0.7978846
        %v1501 = vmul.f32 %v1437, 0.7978846
        %v1502 = vmul.f32 %v1438, 0.7978846
        %v1503 = vmul.f32 %v1439, 0.7978846
        %v1504 = vmul.f32 %v1440, 0.7978846
        %v1505 = vmul.f32 %v1441, 0.7978846
        %v1506 = vmul.f32 %v1442, 0.7978846
        %v1507 = vmul.f32 %v1443, 0.7978846
        %v1508 = vmul.f32 %v1444, 0.7978846
        %v1509 = vmul.f32 %v1445, 0.7978846
        %v1510 = vmul.f32 %v1446, 0.7978846
        %v1511 = vmul.f32 %v1447, 0.7978846
        %v1512 = vmul.f32 %v1448, 0.7978846
        %v1513 = vmul.f32 %v1449, 0.7978846
        %v1514 = vmul.f32 %v1450, 0.7978846
        %v1515 = vmul.f32 %v1451, 0.7978846
        %v1516 = vmul.f32 %v1452, 0.7978846
        %v1517 = vmul.f32 %v1453, 0.7978846
        %v1518 = vmul.f32 %v1454, 0.7978846
        %v1519 = vmul.f32 %v1455, 0.7978846
        %v1520 = vmul.f32 %v1456, 0.7978846
        %v1521 = vmul.f32 %v1457, 0.7978846
        %v1522 = vmul.f32 %v1458, 0.7978846
        %v1523 = vmul.f32 %v1459, 0.7978846
        %v1524 = vmul.f32 %v1460, 0.7978846
        %v1525 = vmul.f32 %v1461, 0.7978846
        %v1526 = vmul.f32 %v1462, 0.7978846
        %v1527 = vmul.f32 %v1463, 0.7978846
        %v1528 = vmul.f32 %v1464, 0.7978846
        %v1529 = vmul.f32 %v1465, 0.7978846
        %v1530 = vmul.f32 %v1466, 0.7978846
        %v1531 = vmul.f32 %v1467, 0.7978846
        %v1532 = vmul.f32 %v1468, 0.7978846
        %v1533 = vmul.f32 %v1469, 0.7978846
        %v1534 = vmul.f32 %v1470, 0.7978846
        %v1535 = vmul.f32 %v1471, 0.7978846
        %v1536 = vmul.f32 %v1472, 0.7978846
        %v1537 = vmul.f32 %v1473, 0.7978846
        %v1538 = vmul.f32 %v1474, 0.7978846
        %v1539 = vmul.f32 %v1475, 0.7978846
        %v1540 = vmul.f32 %v1476, 0.7978846
        %v1541 = vmul.f32 %v1477, 0.7978846
        %v1542 = vmul.f32 %v1478, 0.7978846
        %v1543 = vmul.f32 %v1479, 0.7978846
        %v1544 = vmul.f32 %v1480, 0.7978846
        %v1545 = vmul.f32 %v1481, 0.7978846
        %v1546 = vtanh.pop %v1482
        %v1547 = vtanh.pop %v1483
        %v1548 = vtanh.pop %v1484
        %v1549 = vtanh.pop %v1485
        %v1550 = vtanh.pop %v1486
        %v1551 = vtanh.pop %v1487
        %v1552 = vtanh.pop %v1488
        %v1553 = vtanh.pop %v1489
        %v1554 = vtanh.pop %v1490
        %v1555 = vtanh.pop %v1491
        %v1556 = vtanh.pop %v1492
        %v1557 = vtanh.pop %v1493
        %v1558 = vtanh.pop %v1494
        %v1559 = vtanh.pop %v1495
        %v1560 = vtanh.pop %v1496
        %v1561 = vtanh.pop %v1497
        %v1562 = vtanh.pop %v1498
        %v1563 = vtanh.pop %v1499
        %v1564 = vtanh.pop %v1500
        %v1565 = vtanh.pop %v1501
        %v1566 = vtanh.pop %v1502
        %v1567 = vtanh.pop %v1503
        %v1568 = vtanh.pop %v1504
        %v1569 = vtanh.pop %v1505
        %v1570 = vtanh.pop %v1506
        %v1571 = vtanh.pop %v1507
        %v1572 = vtanh.pop %v1508
        %v1573 = vtanh.pop %v1509
        %v1574 = vtanh.pop %v1510
        %v1575 = vtanh.pop %v1511
        %v1576 = vtanh.pop %v1512
        %v1577 = vtanh.pop %v1513
        %v1578 = vtanh.pop %v1514
        %v1579 = vtanh.pop %v1515
        %v1580 = vtanh.pop %v1516
        %v1581 = vtanh.pop %v1517
        %v1582 = vtanh.pop %v1518
        %v1583 = vtanh.pop %v1519
        %v1584 = vtanh.pop %v1520
        %v1585 = vtanh.pop %v1521
        %v1586 = vtanh.pop %v1522
        %v1587 = vtanh.pop %v1523
        %v1588 = vtanh.pop %v1524
        %v1589 = vtanh.pop %v1525
        %v1590 = vtanh.pop %v1526
        %v1591 = vtanh.pop %v1527
        %v1592 = vtanh.pop %v1528
        %v1593 = vtanh.pop %v1529
        %v1594 = vtanh.pop %v1530
        %v1595 = vtanh.pop %v1531
        %v1596 = vtanh.pop %v1532
        %v1597 = vtanh.pop %v1533
        %v1598 = vtanh.pop %v1534
        %v1599 = vtanh.pop %v1535
        %v1600 = vtanh.pop %v1536
        %v1601 = vtanh.pop %v1537
        %v1602 = vtanh.pop %v1538
        %v1603 = vtanh.pop %v1539
        %v1604 = vtanh.pop %v1540
        %v1605 = vtanh.pop %v1541
        %v1606 = vtanh.pop %v1542
        %v1607 = vtanh.pop %v1543
        %v1608 = vtanh.pop %v1544
        %v1609 = vtanh.pop %v1545
        %v1610 = vadd.f32 %v1546, 1.0
        %v1611 = vadd.f32 %v1547, 1.0
        %v1612 = vadd.f32 %v1548, 1.0
        %v1613 = vadd.f32 %v1549, 1.0
        %v1614 = vadd.f32 %v1550, 1.0
        %v1615 = vadd.f32 %v1551, 1.0
        %v1616 = vadd.f32 %v1552, 1.0
        %v1617 = vadd.f32 %v1553, 1.0
        %v1618 = vadd.f32 %v1554, 1.0
        %v1619 = vadd.f32 %v1555, 1.0
        %v1620 = vadd.f32 %v1556, 1.0
        %v1621 = vadd.f32 %v1557, 1.0
        %v1622 = vadd.f32 %v1558, 1.0
        %v1623 = vadd.f32 %v1559, 1.0
        %v1624 = vadd.f32 %v1560, 1.0
        %v1625 = vadd.f32 %v1561, 1.0
        %v1626 = vadd.f32 %v1562, 1.0
        %v1627 = vadd.f32 %v1563, 1.0
        %v1628 = vadd.f32 %v1564, 1.0
        %v1629 = vadd.f32 %v1565, 1.0
        %v1630 = vadd.f32 %v1566, 1.0
        %v1631 = vadd.f32 %v1567, 1.0
        %v1632 = vadd.f32 %v1568, 1.0
        %v1633 = vadd.f32 %v1569, 1.0
        %v1634 = vadd.f32 %v1570, 1.0
        %v1635 = vadd.f32 %v1571, 1.0
        %v1636 = vadd.f32 %v1572, 1.0
        %v1637 = vadd.f32 %v1573, 1.0
        %v1638 = vadd.f32 %v1574, 1.0
        %v1639 = vadd.f32 %v1575, 1.0
        %v1640 = vadd.f32 %v1576, 1.0
        %v1641 = vadd.f32 %v1577, 1.0
        %v1642 = vadd.f32 %v1578, 1.0
        %v1643 = vadd.f32 %v1579, 1.0
        %v1644 = vadd.f32 %v1580, 1.0
        %v1645 = vadd.f32 %v1581, 1.0
        %v1646 = vadd.f32 %v1582, 1.0
        %v1647 = vadd.f32 %v1583, 1.0
        %v1648 = vadd.f32 %v1584, 1.0
        %v1649 = vadd.f32 %v1585, 1.0
        %v1650 = vadd.f32 %v1586, 1.0
        %v1651 = vadd.f32 %v1587, 1.0
        %v1652 = vadd.f32 %v1588, 1.0
        %v1653 = vadd.f32 %v1589, 1.0
        %v1654 = vadd.f32 %v1590, 1.0
        %v1655 = vadd.f32 %v1591, 1.0
        %v1656 = vadd.f32 %v1592, 1.0
        %v1657 = vadd.f32 %v1593, 1.0
        %v1658 = vadd.f32 %v1594, 1.0
        %v1659 = vadd.f32 %v1595, 1.0
        %v1660 = vadd.f32 %v1596, 1.0
        %v1661 = vadd.f32 %v1597, 1.0
        %v1662 = vadd.f32 %v1598, 1.0
        %v1663 = vadd.f32 %v1599, 1.0
        %v1664 = vadd.f32 %v1600, 1.0
        %v1665 = vadd.f32 %v1601, 1.0
        %v1666 = vadd.f32 %v1602, 1.0
        %v1667 = vadd.f32 %v1603, 1.0
        %v1668 = vadd.f32 %v1604, 1.0
        %v1669 = vadd.f32 %v1605, 1.0
        %v1670 = vadd.f32 %v1606, 1.0
        %v1671 = vadd.f32 %v1607, 1.0
        %v1672 = vadd.f32 %v1608, 1.0
        %v1673 = vadd.f32 %v1609, 1.0
        %v1674 = vmul.f32 %v1610, 0.5
        %v1675 = vmul.f32 %v1611, 0.5
        %v1676 = vmul.f32 %v1612, 0.5
        %v1677 = vmul.f32 %v1613, 0.5
        %v1678 = vmul.f32 %v1614, 0.5
        %v1679 = vmul.f32 %v1615, 0.5
        %v1680 = vmul.f32 %v1616, 0.5
        %v1681 = vmul.f32 %v1617, 0.5
        %v1682 = vmul.f32 %v1618, 0.5
        %v1683 = vmul.f32 %v1619, 0.5
        %v1684 = vmul.f32 %v1620, 0.5
        %v1685 = vmul.f32 %v1621, 0.5
        %v1686 = vmul.f32 %v1622, 0.5
        %v1687 = vmul.f32 %v1623, 0.5
        %v1688 = vmul.f32 %v1624, 0.5
        %v1689 = vmul.f32 %v1625, 0.5
        %v1690 = vmul.f32 %v1626, 0.5
        %v1691 = vmul.f32 %v1627, 0.5
        %v1692 = vmul.f32 %v1628, 0.5
        %v1693 = vmul.f32 %v1629, 0.5
        %v1694 = vmul.f32 %v1630, 0.5
        %v1695 = vmul.f32 %v1631, 0.5
        %v1696 = vmul.f32 %v1632, 0.5
        %v1697 = vmul.f32 %v1633, 0.5
        %v1698 = vmul.f32 %v1634, 0.5
        %v1699 = vmul.f32 %v1635, 0.5
        %v1700 = vmul.f32 %v1636, 0.5
        %v1701 = vmul.f32 %v1637, 0.5
        %v1702 = vmul.f32 %v1638, 0.5
        %v1703 = vmul.f32 %v1639, 0.5
        %v1704 = vmul.f32 %v1640, 0.5
        %v1705 = vmul.f32 %v1641, 0.5
        %v1706 = vmul.f32 %v1642, 0.5
        %v1707 = vmul.f32 %v1643, 0.5
        %v1708 = vmul.f32 %v1644, 0.5
        %v1709 = vmul.f32 %v1645, 0.5
        %v1710 = vmul.f32 %v1646, 0.5
        %v1711 = vmul.f32 %v1647, 0.5
        %v1712 = vmul.f32 %v1648, 0.5
        %v1713 = vmul.f32 %v1649, 0.5
        %v1714 = vmul.f32 %v1650, 0.5
        %v1715 = vmul.f32 %v1651, 0.5
        %v1716 = vmul.f32 %v1652, 0.5
        %v1717 = vmul.f32 %v1653, 0.5
        %v1718 = vmul.f32 %v1654, 0.5
        %v1719 = vmul.f32 %v1655, 0.5
        %v1720 = vmul.f32 %v1656, 0.5
        %v1721 = vmul.f32 %v1657, 0.5
        %v1722 = vmul.f32 %v1658, 0.5
        %v1723 = vmul.f32 %v1659, 0.5
        %v1724 = vmul.f32 %v1660, 0.5
        %v1725 = vmul.f32 %v1661, 0.5
        %v1726 = vmul.f32 %v1662, 0.5
        %v1727 = vmul.f32 %v1663, 0.5
        %v1728 = vmul.f32 %v1664, 0.5
        %v1729 = vmul.f32 %v1665, 0.5
        %v1730 = vmul.f32 %v1666, 0.5
        %v1731 = vmul.f32 %v1667, 0.5
        %v1732 = vmul.f32 %v1668, 0.5
        %v1733 = vmul.f32 %v1669, 0.5
        %v1734 = vmul.f32 %v1670, 0.5
        %v1735 = vmul.f32 %v1671, 0.5
        %v1736 = vmul.f32 %v1672, 0.5
        %v1737 = vmul.f32 %v1673, 0.5
        %v1738 = vmul.f32 %v1068, %v1674
        %v1739 = vmul.f32 %v1070, %v1675
        %v1740 = vmul.f32 %v1072, %v1676
        %v1741 = vmul.f32 %v1074, %v1677
        %v1742 = vmul.f32 %v1078, %v1678
        %v1743 = vmul.f32 %v1080, %v1679
        %v1744 = vmul.f32 %v1082, %v1680
        %v1745 = vmul.f32 %v1084, %v1681
        %v1746 = vmul.f32 %v1088, %v1682
        %v1747 = vmul.f32 %v1090, %v1683
        %v1748 = vmul.f32 %v1092, %v1684
        %v1749 = vmul.f32 %v1094, %v1685
        %v1750 = vmul.f32 %v1098, %v1686
        %v1751 = vmul.f32 %v1100, %v1687
        %v1752 = vmul.f32 %v1102, %v1688
        %v1753 = vmul.f32 %v1104, %v1689
        %v1754 = vmul.f32 %v1108, %v1690
        %v1755 = vmul.f32 %v1110, %v1691
        %v1756 = vmul.f32 %v1112, %v1692
        %v1757 = vmul.f32 %v1114, %v1693
        %v1758 = vmul.f32 %v1118, %v1694
        %v1759 = vmul.f32 %v1120, %v1695
        %v1760 = vmul.f32 %v1122, %v1696
        %v1761 = vmul.f32 %v1124, %v1697
        %v1762 = vmul.f32 %v1128, %v1698
        %v1763 = vmul.f32 %v1130, %v1699
        %v1764 = vmul.f32 %v1132, %v1700
        %v1765 = vmul.f32 %v1134, %v1701
        %v1766 = vmul.f32 %v1138, %v1702
        %v1767 = vmul.f32 %v1140, %v1703
        %v1768 = vmul.f32 %v1142, %v1704
        %v1769 = vmul.f32 %v1144, %v1705
        %v1770 = vmul.f32 %v1148, %v1706
        %v1771 = vmul.f32 %v1150, %v1707
        %v1772 = vmul.f32 %v1152, %v1708
        %v1773 = vmul.f32 %v1154, %v1709
        %v1774 = vmul.f32 %v1158, %v1710
        %v1775 = vmul.f32 %v1160, %v1711
        %v1776 = vmul.f32 %v1162, %v1712
        %v1777 = vmul.f32 %v1164, %v1713
        %v1778 = vmul.f32 %v1168, %v1714
        %v1779 = vmul.f32 %v1170, %v1715
        %v1780 = vmul.f32 %v1172, %v1716
        %v1781 = vmul.f32 %v1174, %v1717
        %v1782 = vmul.f32 %v1178, %v1718
        %v1783 = vmul.f32 %v1180, %v1719
        %v1784 = vmul.f32 %v1182, %v1720
        %v1785 = vmul.f32 %v1184, %v1721
        %v1786 = vmul.f32 %v1188, %v1722
        %v1787 = vmul.f32 %v1190, %v1723
        %v1788 = vmul.f32 %v1192, %v1724
        %v1789 = vmul.f32 %v1194, %v1725
        %v1790 = vmul.f32 %v1198, %v1726
        %v1791 = vmul.f32 %v1200, %v1727
        %v1792 = vmul.f32 %v1202, %v1728
        %v1793 = vmul.f32 %v1204, %v1729
        %v1794 = vmul.f32 %v1208, %v1730
        %v1795 = vmul.f32 %v1210, %v1731
        %v1796 = vmul.f32 %v1212, %v1732
        %v1797 = vmul.f32 %v1214, %v1733
        %v1798 = vmul.f32 %v1218, %v1734
        %v1799 = vmul.f32 %v1220, %v1735
        %v1800 = vmul.f32 %v1222, %v1736
        %v1801 = vmul.f32 %v1224, %v1737
        %v1802 = vld [vmem:[#allocation3] sm:$0xff]
        %v1803 = vld [vmem:[#allocation3 + $0x8] sm:$0xff]
        %v1804 = vld [vmem:[#allocation3 + $0x10] sm:$0xff]
        %v1805 = vld [vmem:[#allocation3 + $0x18] sm:$0xff]
        %v1806 = vld [vmem:[#allocation3 + $0x20] sm:$0xff]
        %v1807 = vld [vmem:[#allocation3 + $0x28] sm:$0xff]
        %v1808 = vld [vmem:[#allocation3 + $0x30] sm:$0xff]
        %v1809 = vld [vmem:[#allocation3 + $0x38] sm:$0xff]
        %v1810 = vld [vmem:[#allocation3 + $0x40] sm:$0xff]
        %v1811 = vld [vmem:[#allocation3 + $0x48] sm:$0xff]
        %v1812 = vld [vmem:[#allocation3 + $0x50] sm:$0xff]
        %v1813 = vld [vmem:[#allocation3 + $0x58] sm:$0xff]
        %v1814 = vld [vmem:[#allocation3 + $0x60] sm:$0xff]
        %v1815 = vld [vmem:[#allocation3 + $0x68] sm:$0xff]
        %v1816 = vld [vmem:[#allocation3 + $0x70] sm:$0xff]
        %v1817 = vld [vmem:[#allocation3 + $0x78] sm:$0xff]
        %v1818 = vld [vmem:[#allocation3 + $0x80] sm:$0xff]
        %v1819 = vld [vmem:[#allocation3 + $0x88] sm:$0xff]
        %v1820 = vld [vmem:[#allocation3 + $0x90] sm:$0xff]
        %v1821 = vld [vmem:[#allocation3 + $0x98] sm:$0xff]
        %v1822 = vld [vmem:[#allocation3 + $0xa0] sm:$0xff]
        %v1823 = vld [vmem:[#allocation3 + $0xa8] sm:$0xff]
        %v1824 = vld [vmem:[#allocation3 + $0xb0] sm:$0xff]
        %v1825 = vld [vmem:[#allocation3 + $0xb8] sm:$0xff]
        %v1826 = vld [vmem:[#allocation3 + $0xc0] sm:$0xff]
        %v1827 = vld [vmem:[#allocation3 + $0xc8] sm:$0xff]
        %v1828 = vld [vmem:[#allocation3 + $0xd0] sm:$0xff]
        %v1829 = vld [vmem:[#allocation3 + $0xd8] sm:$0xff]
        %v1830 = vld [vmem:[#allocation3 + $0xe0] sm:$0xff]
        %v1831 = vld [vmem:[#allocation3 + $0xe8] sm:$0xff]
        %v1832 = vld [vmem:[#allocation3 + $0xf0] sm:$0xff]
        %v1833 = vld [vmem:[#allocation3 + $0xf8] sm:$0xff]
        %v1834 = vpack.c.bf16 %v1740, %v1738
        %v1835 = vpack.c.bf16 %v1741, %v1739
        %v1836 = vpack.c.bf16 %v1744, %v1742
        %v1837 = vpack.c.bf16 %v1745, %v1743
        %v1838 = vpack.c.bf16 %v1748, %v1746
        %v1839 = vpack.c.bf16 %v1749, %v1747
        %v1840 = vpack.c.bf16 %v1752, %v1750
        %v1841 = vpack.c.bf16 %v1753, %v1751
        %v1842 = vpack.c.bf16 %v1756, %v1754
        %v1843 = vpack.c.bf16 %v1757, %v1755
        %v1844 = vpack.c.bf16 %v1760, %v1758
        %v1845 = vpack.c.bf16 %v1761, %v1759
        %v1846 = vpack.c.bf16 %v1764, %v1762
        %v1847 = vpack.c.bf16 %v1765, %v1763
        %v1848 = vpack.c.bf16 %v1768, %v1766
        %v1849 = vpack.c.bf16 %v1769, %v1767
        %v1850 = vpack.c.bf16 %v1772, %v1770
        %v1851 = vpack.c.bf16 %v1773, %v1771
        %v1852 = vpack.c.bf16 %v1776, %v1774
        %v1853 = vpack.c.bf16 %v1777, %v1775
        %v1854 = vpack.c.bf16 %v1780, %v1778
        %v1855 = vpack.c.bf16 %v1781, %v1779
        %v1856 = vpack.c.bf16 %v1784, %v1782
        %v1857 = vpack.c.bf16 %v1785, %v1783
        %v1858 = vpack.c.bf16 %v1788, %v1786
        %v1859 = vpack.c.bf16 %v1789, %v1787
        %v1860 = vpack.c.bf16 %v1792, %v1790
        %v1861 = vpack.c.bf16 %v1793, %v1791
        %v1862 = vpack.c.bf16 %v1796, %v1794
        %v1863 = vpack.c.bf16 %v1797, %v1795
        %v1864 = vpack.c.bf16 %v1800, %v1798
        %v1865 = vpack.c.bf16 %v1801, %v1799
        %v1866 = vld [vmem:[#allocation9] sm:$0xf]
        %v1867 = vld [vmem:[#allocation9 + $0x4] sm:$0xf]
        %v1868 = vld [vmem:[#allocation9 + $0x8] sm:$0xf]
        %v1869 = vld [vmem:[#allocation9 + $0xc] sm:$0xf]
        %v1870 = vld [vmem:[#allocation9 + $0x10] sm:$0xf]
        %v1871 = vld [vmem:[#allocation9 + $0x14] sm:$0xf]
        %v1872 = vld [vmem:[#allocation9 + $0x18] sm:$0xf]
        %v1873 = vld [vmem:[#allocation9 + $0x1c] sm:$0xf]
        %v1874 = vld [vmem:[#allocation9 + $0x20] sm:$0xf]
        %v1875 = vld [vmem:[#allocation9 + $0x24] sm:$0xf]
        %v1876 = vld [vmem:[#allocation9 + $0x28] sm:$0xf]
        %v1877 = vld [vmem:[#allocation9 + $0x2c] sm:$0xf]
        %v1878 = vld [vmem:[#allocation9 + $0x30] sm:$0xf]
        %v1879 = vld [vmem:[#allocation9 + $0x34] sm:$0xf]
        %v1880 = vld [vmem:[#allocation9 + $0x38] sm:$0xf]
        %v1881 = vld [vmem:[#allocation9 + $0x3c] sm:$0xf]
        %v1882 = vld [vmem:[#allocation9 + $0x40] sm:$0xf]
        %v1883 = vld [vmem:[#allocation9 + $0x44] sm:$0xf]
        %v1884 = vld [vmem:[#allocation9 + $0x48] sm:$0xf]
        %v1885 = vld [vmem:[#allocation9 + $0x4c] sm:$0xf]
        %v1886 = vld [vmem:[#allocation9 + $0x50] sm:$0xf]
        %v1887 = vld [vmem:[#allocation9 + $0x54] sm:$0xf]
        %v1888 = vld [vmem:[#allocation9 + $0x58] sm:$0xf]
        %v1889 = vld [vmem:[#allocation9 + $0x5c] sm:$0xf]
        %v1890 = vld [vmem:[#allocation9 + $0x60] sm:$0xf]
        %v1891 = vld [vmem:[#allocation9 + $0x64] sm:$0xf]
        %v1892 = vld [vmem:[#allocation9 + $0x68] sm:$0xf]
        %v1893 = vld [vmem:[#allocation9 + $0x6c] sm:$0xf]
        %v1894 = vld [vmem:[#allocation9 + $0x70] sm:$0xf]
        %v1895 = vld [vmem:[#allocation9 + $0x74] sm:$0xf]
        %v1896 = vld [vmem:[#allocation9 + $0x78] sm:$0xf]
        %v1897 = vld [vmem:[#allocation9 + $0x7c] sm:$0xf]
        %v1930 = vunpack.c.l.b16 %v1866
        %v1931 = vunpack.c.l.b16 %v1867
        %v1932 = vunpack.c.l.b16 %v1868
        %v1933 = vunpack.c.l.b16 %v1869
        %v1934 = vunpack.c.l.b16 %v1870
        %v1935 = vunpack.c.l.b16 %v1871
        %v1936 = vunpack.c.l.b16 %v1872
        %v1937 = vunpack.c.l.b16 %v1873
        %v1938 = vunpack.c.l.b16 %v1874
        %v1939 = vunpack.c.l.b16 %v1875
        %v1940 = vunpack.c.l.b16 %v1876
        %v1941 = vunpack.c.l.b16 %v1877
        %v1942 = vunpack.c.l.b16 %v1878
        %v1943 = vunpack.c.l.b16 %v1879
        %v1944 = vunpack.c.l.b16 %v1880
        %v1945 = vunpack.c.l.b16 %v1881
        %v1946 = vunpack.c.l.b16 %v1882
        %v1947 = vunpack.c.l.b16 %v1883
        %v1948 = vunpack.c.l.b16 %v1884
        %v1949 = vunpack.c.l.b16 %v1885
        %v1950 = vunpack.c.l.b16 %v1886
        %v1951 = vunpack.c.l.b16 %v1887
        %v1952 = vunpack.c.l.b16 %v1888
        %v1953 = vunpack.c.l.b16 %v1889
        %v1954 = vunpack.c.l.b16 %v1890
        %v1955 = vunpack.c.l.b16 %v1891
        %v1956 = vunpack.c.l.b16 %v1892
        %v1957 = vunpack.c.l.b16 %v1893
        %v1958 = vunpack.c.l.b16 %v1894
        %v1959 = vunpack.c.l.b16 %v1895
        %v1960 = vunpack.c.l.b16 %v1896
        %v1961 = vunpack.c.l.b16 %v1897
        %v1962 = vpack.c.b16 %v1931, %v1930
        %v1963 = vpack.c.b16 %v1933, %v1932
        %v1964 = vpack.c.b16 %v1935, %v1934
        %v1965 = vpack.c.b16 %v1937, %v1936
        %v1966 = vpack.c.b16 %v1939, %v1938
        %v1967 = vpack.c.b16 %v1941, %v1940
        %v1968 = vpack.c.b16 %v1943, %v1942
        %v1969 = vpack.c.b16 %v1945, %v1944
        %v1970 = vpack.c.b16 %v1947, %v1946
        %v1971 = vpack.c.b16 %v1949, %v1948
        %v1972 = vpack.c.b16 %v1951, %v1950
        %v1973 = vpack.c.b16 %v1953, %v1952
        %v1974 = vpack.c.b16 %v1955, %v1954
        %v1975 = vpack.c.b16 %v1957, %v1956
        %v1976 = vpack.c.b16 %v1959, %v1958
        %v1977 = vpack.c.b16 %v1961, %v1960
        %1994 = vmatprep.subr.bf16.mxu0 0
        %1995 = vmatpush1.bf16.msra.mxu0 %v1962
        %1996 = vmatprep.subr.bf16.mxu0 0
        %1997 = vmatpush1.bf16.msra.mxu0 %v1963
        %1998 = vmatprep.subr.bf16.mxu0 0
        %1999 = vmatpush1.bf16.msra.mxu0 %v1964
        %2000 = vmatprep.subr.bf16.mxu0 0
        %2001 = vmatpush1.bf16.msra.mxu0 %v1965
        %2002 = vmatprep.subr.bf16.mxu0 0
        %2003 = vmatpush1.bf16.msra.mxu0 %v1966
        %2004 = vmatprep.subr.bf16.mxu0 0
        %2005 = vmatpush1.bf16.msra.mxu0 %v1967
        %2006 = vmatprep.subr.bf16.mxu0 0
        %2007 = vmatpush1.bf16.msra.mxu0 %v1968
        %2008 = vmatprep.subr.bf16.mxu0 0
        %2009 = vmatpush1.bf16.msra.mxu0 %v1969
        %2010 = vmatprep.subr.bf16.mxu0 0
        %2011 = vmatpush1.bf16.msra.mxu0 %v1970
        %2012 = vmatprep.subr.bf16.mxu0 0
        %2013 = vmatpush1.bf16.msra.mxu0 %v1971
        %2014 = vmatprep.subr.bf16.mxu0 0
        %2015 = vmatpush1.bf16.msra.mxu0 %v1972
        %2016 = vmatprep.subr.bf16.mxu0 0
        %2017 = vmatpush1.bf16.msra.mxu0 %v1973
        %2018 = vmatprep.subr.bf16.mxu0 0
        %2019 = vmatpush1.bf16.msra.mxu0 %v1974
        %2020 = vmatprep.subr.bf16.mxu0 0
        %2021 = vmatpush1.bf16.msra.mxu0 %v1975
        %2022 = vmatprep.subr.bf16.mxu0 0
        %2023 = vmatpush1.bf16.msra.mxu0 %v1976
        %2024 = vmatprep.subr.bf16.mxu0 0
        %2025 = vmatpush1.bf16.msra.mxu0 %v1977
        %2026 = vmatprep.mubr.bf16.mxu0 %v1835
        %2027 = vmatmul.mubr.bf16.gmra.mrb[0].mxu0 %v1834
        %v2028 = vpop.f32.mrb[0].mxu0
        %v2029 = vadd.f32 0.0, %v2028
        %v2030 = vpop.f32.mrb[0].mxu0
        %v2031 = vpop.f32.mrb[0].mxu0
        %v2032 = vadd.f32 0.0, %v2031
        %v2033 = vpop.f32.mrb[0].mxu0
        %2034 = vmatprep.mubr.bf16.mxu0 %v1837
        %2035 = vmatmul.mubr.bf16.gmra.mrb[0].mxu0 %v1836
        %v2036 = vpop.f32.mrb[0].mxu0
        %v2037 = vadd.f32 0.0, %v2036
        %v2038 = vpop.f32.mrb[0].mxu0
        %v2039 = vpop.f32.mrb[0].mxu0
        %v2040 = vadd.f32 0.0, %v2039
        %v2041 = vpop.f32.mrb[0].mxu0
        %2042 = vmatprep.mubr.bf16.mxu0 %v1839
        %2043 = vmatmul.mubr.bf16.gmra.mrb[0].mxu0 %v1838
        %v2044 = vpop.f32.mrb[0].mxu0
        %v2045 = vadd.f32 0.0, %v2044
        %v2046 = vpop.f32.mrb[0].mxu0
        %v2047 = vpop.f32.mrb[0].mxu0
        %v2048 = vadd.f32 0.0, %v2047
        %v2049 = vpop.f32.mrb[0].mxu0
        %2050 = vmatprep.mubr.bf16.mxu0 %v1841
        %2051 = vmatmul.mubr.bf16.gmra.mrb[0].mxu0 %v1840
        %v2052 = vpop.f32.mrb[0].mxu0
        %v2053 = vadd.f32 0.0, %v2052
        %v2054 = vpop.f32.mrb[0].mxu0
        %v2055 = vpop.f32.mrb[0].mxu0
        %v2056 = vadd.f32 0.0, %v2055
        %v2057 = vpop.f32.mrb[0].mxu0
        %2058 = vmatprep.mubr.bf16.mxu0 %v1843
        %2059 = vmatmul.mubr.bf16.gmra.mrb[0].mxu0 %v1842
        %v2060 = vpop.f32.mrb[0].mxu0
        %v2061 = vadd.f32 0.0, %v2060
        %v2062 = vpop.f32.mrb[0].mxu0
        %v2063 = vpop.f32.mrb[0].mxu0
        %v2064 = vadd.f32 0.0, %v2063
        %v2065 = vpop.f32.mrb[0].mxu0
        %2066 = vmatprep.mubr.bf16.mxu0 %v1845
        %2067 = vmatmul.mubr.bf16.gmra.mrb[0].mxu0 %v1844
        %v2068 = vpop.f32.mrb[0].mxu0
        %v2069 = vadd.f32 0.0, %v2068
        %v2070 = vpop.f32.mrb[0].mxu0
        %v2071 = vpop.f32.mrb[0].mxu0
        %v2072 = vadd.f32 0.0, %v2071
        %v2073 = vpop.f32.mrb[0].mxu0
        %2074 = vmatprep.mubr.bf16.mxu0 %v1847
        %2075 = vmatmul.mubr.bf16.gmra.mrb[0].mxu0 %v1846
        %v2076 = vpop.f32.mrb[0].mxu0
        %v2077 = vadd.f32 0.0, %v2076
        %v2078 = vpop.f32.mrb[0].mxu0
        %v2079 = vpop.f32.mrb[0].mxu0
        %v2080 = vadd.f32 0.0, %v2079
        %v2081 = vpop.f32.mrb[0].mxu0
        %2082 = vmatprep.mubr.bf16.mxu0 %v1849
        %2083 = vmatmul.mubr.bf16.gmra.mrb[0].mxu0 %v1848
        %v2084 = vpop.f32.mrb[0].mxu0
        %v2085 = vadd.f32 0.0, %v2084
        %v2086 = vpop.f32.mrb[0].mxu0
        %v2087 = vpop.f32.mrb[0].mxu0
        %v2088 = vadd.f32 0.0, %v2087
        %v2089 = vpop.f32.mrb[0].mxu0
        %2090 = vmatprep.mubr.bf16.mxu0 %v1851
        %2091 = vmatmul.mubr.bf16.gmra.mrb[0].mxu0 %v1850
        %v2092 = vpop.f32.mrb[0].mxu0
        %v2093 = vadd.f32 0.0, %v2092
        %v2094 = vpop.f32.mrb[0].mxu0
        %v2095 = vpop.f32.mrb[0].mxu0
        %v2096 = vadd.f32 0.0, %v2095
        %v2097 = vpop.f32.mrb[0].mxu0
        %2098 = vmatprep.mubr.bf16.mxu0 %v1853
        %2099 = vmatmul.mubr.bf16.gmra.mrb[0].mxu0 %v1852
        %v2100 = vpop.f32.mrb[0].mxu0
        %v2101 = vadd.f32 0.0, %v2100
        %v2102 = vpop.f32.mrb[0].mxu0
        %v2103 = vpop.f32.mrb[0].mxu0
        %v2104 = vadd.f32 0.0, %v2103
        %v2105 = vpop.f32.mrb[0].mxu0
        %2106 = vmatprep.mubr.bf16.mxu0 %v1855
        %2107 = vmatmul.mubr.bf16.gmra.mrb[0].mxu0 %v1854
        %v2108 = vpop.f32.mrb[0].mxu0
        %v2109 = vadd.f32 0.0, %v2108
        %v2110 = vpop.f32.mrb[0].mxu0
        %v2111 = vpop.f32.mrb[0].mxu0
        %v2112 = vadd.f32 0.0, %v2111
        %v2113 = vpop.f32.mrb[0].mxu0
        %2114 = vmatprep.mubr.bf16.mxu0 %v1857
        %2115 = vmatmul.mubr.bf16.gmra.mrb[0].mxu0 %v1856
        %v2116 = vpop.f32.mrb[0].mxu0
        %v2117 = vadd.f32 0.0, %v2116
        %v2118 = vpop.f32.mrb[0].mxu0
        %v2119 = vpop.f32.mrb[0].mxu0
        %v2120 = vadd.f32 0.0, %v2119
        %v2121 = vpop.f32.mrb[0].mxu0
        %2122 = vmatprep.mubr.bf16.mxu0 %v1859
        %2123 = vmatmul.mubr.bf16.gmra.mrb[0].mxu0 %v1858
        %v2124 = vpop.f32.mrb[0].mxu0
        %v2125 = vadd.f32 0.0, %v2124
        %v2126 = vpop.f32.mrb[0].mxu0
        %v2127 = vpop.f32.mrb[0].mxu0
        %v2128 = vadd.f32 0.0, %v2127
        %v2129 = vpop.f32.mrb[0].mxu0
        %2130 = vmatprep.mubr.bf16.mxu0 %v1861
        %2131 = vmatmul.mubr.bf16.gmra.mrb[0].mxu0 %v1860
        %v2132 = vpop.f32.mrb[0].mxu0
        %v2133 = vadd.f32 0.0, %v2132
        %v2134 = vpop.f32.mrb[0].mxu0
        %v2135 = vpop.f32.mrb[0].mxu0
        %v2136 = vadd.f32 0.0, %v2135
        %v2137 = vpop.f32.mrb[0].mxu0
        %2138 = vmatprep.mubr.bf16.mxu0 %v1863
        %2139 = vmatmul.mubr.bf16.gmra.mrb[0].mxu0 %v1862
        %v2140 = vpop.f32.mrb[0].mxu0
        %v2141 = vadd.f32 0.0, %v2140
        %v2142 = vpop.f32.mrb[0].mxu0
        %v2143 = vpop.f32.mrb[0].mxu0
        %v2144 = vadd.f32 0.0, %v2143
        %v2145 = vpop.f32.mrb[0].mxu0
        %2146 = vmatprep.mubr.bf16.mxu0 %v1865
        %2147 = vmatmul.mubr.bf16.gmra.mrb[0].mxu0 %v1864
        %v2148 = vpop.f32.mrb[0].mxu0
        %v2149 = vadd.f32 0.0, %v2148
        %v2150 = vpop.f32.mrb[0].mxu0
        %v2151 = vpop.f32.mrb[0].mxu0
        %v2152 = vadd.f32 0.0, %v2151
        %v2153 = vpop.f32.mrb[0].mxu0
        %2154 = vdwg.mxu0
        %v2155 = vadd.f32 %v1802, %v2029
        %v2156 = vadd.f32 %v1803, %v2032
        %v2157 = vadd.f32 %v1804, %v2037
        %v2158 = vadd.f32 %v1805, %v2040
        %v2159 = vadd.f32 %v1806, %v2045
        %v2160 = vadd.f32 %v1807, %v2048
        %v2161 = vadd.f32 %v1808, %v2053
        %v2162 = vadd.f32 %v1809, %v2056
        %v2163 = vadd.f32 %v1810, %v2061
        %v2164 = vadd.f32 %v1811, %v2064
        %v2165 = vadd.f32 %v1812, %v2069
        %v2166 = vadd.f32 %v1813, %v2072
        %v2167 = vadd.f32 %v1814, %v2077
        %v2168 = vadd.f32 %v1815, %v2080
        %v2169 = vadd.f32 %v1816, %v2085
        %v2170 = vadd.f32 %v1817, %v2088
        %v2171 = vadd.f32 %v1818, %v2093
        %v2172 = vadd.f32 %v1819, %v2096
        %v2173 = vadd.f32 %v1820, %v2101
        %v2174 = vadd.f32 %v1821, %v2104
        %v2175 = vadd.f32 %v1822, %v2109
        %v2176 = vadd.f32 %v1823, %v2112
        %v2177 = vadd.f32 %v1824, %v2117
        %v2178 = vadd.f32 %v1825, %v2120
        %v2179 = vadd.f32 %v1826, %v2125
        %v2180 = vadd.f32 %v1827, %v2128
        %v2181 = vadd.f32 %v1828, %v2133
        %v2182 = vadd.f32 %v1829, %v2136
        %v2183 = vadd.f32 %v1830, %v2141
        %v2184 = vadd.f32 %v1831, %v2144
        %v2185 = vadd.f32 %v1832, %v2149
        %v2186 = vadd.f32 %v1833, %v2152
        %2187 = vst [vmem:[#allocation3] sm:$0xff] %v2155
        %2188 = vst [vmem:[#allocation3 + $0x8] sm:$0xff] %v2156
        %2189 = vst [vmem:[#allocation3 + $0x10] sm:$0xff] %v2157
        %2190 = vst [vmem:[#allocation3 + $0x18] sm:$0xff] %v2158
        %2191 = vst [vmem:[#allocation3 + $0x20] sm:$0xff] %v2159
        %2192 = vst [vmem:[#allocation3 + $0x28] sm:$0xff] %v2160
        %2193 = vst [vmem:[#allocation3 + $0x30] sm:$0xff] %v2161
        %2194 = vst [vmem:[#allocation3 + $0x38] sm:$0xff] %v2162
        %2195 = vst [vmem:[#allocation3 + $0x40] sm:$0xff] %v2163
        %2196 = vst [vmem:[#allocation3 + $0x48] sm:$0xff] %v2164
        %2197 = vst [vmem:[#allocation3 + $0x50] sm:$0xff] %v2165
        %2198 = vst [vmem:[#allocation3 + $0x58] sm:$0xff] %v2166
        %2199 = vst [vmem:[#allocation3 + $0x60] sm:$0xff] %v2167
        %2200 = vst [vmem:[#allocation3 + $0x68] sm:$0xff] %v2168
        %2201 = vst [vmem:[#allocation3 + $0x70] sm:$0xff] %v2169
        %2202 = vst [vmem:[#allocation3 + $0x78] sm:$0xff] %v2170
        %2203 = vst [vmem:[#allocation3 + $0x80] sm:$0xff] %v2171
        %2204 = vst [vmem:[#allocation3 + $0x88] sm:$0xff] %v2172
        %2205 = vst [vmem:[#allocation3 + $0x90] sm:$0xff] %v2173
        %2206 = vst [vmem:[#allocation3 + $0x98] sm:$0xff] %v2174
        %2207 = vst [vmem:[#allocation3 + $0xa0] sm:$0xff] %v2175
        %2208 = vst [vmem:[#allocation3 + $0xa8] sm:$0xff] %v2176
        %2209 = vst [vmem:[#allocation3 + $0xb0] sm:$0xff] %v2177
        %2210 = vst [vmem:[#allocation3 + $0xb8] sm:$0xff] %v2178
        %2211 = vst [vmem:[#allocation3 + $0xc0] sm:$0xff] %v2179
        %2212 = vst [vmem:[#allocation3 + $0xc8] sm:$0xff] %v2180
        %2213 = vst [vmem:[#allocation3 + $0xd0] sm:$0xff] %v2181
        %2214 = vst [vmem:[#allocation3 + $0xd8] sm:$0xff] %v2182
        %2215 = vst [vmem:[#allocation3 + $0xe0] sm:$0xff] %v2183
        %2216 = vst [vmem:[#allocation3 + $0xe8] sm:$0xff] %v2184
        %2217 = vst [vmem:[#allocation3 + $0xf0] sm:$0xff] %v2185
        %2218 = vst [vmem:[#allocation3 + $0xf8] sm:$0xff] %v2186
        // Predicated region
        $region65: #{tpu_custom_call.1} parent=47 // pred_check
          %p2219 = pneg %p378
        $region66: #{tpu_custom_call.1} parent=47 // pred_check_branch
          %2221 = sbr.rel (%p2219) target = $region68
        $region67: #{tpu_custom_call.1} parent=47 // pred_region
          %v2222 = vld [vmem:[#allocation3] sm:$0xff]
          %v2223 = vld [vmem:[#allocation3 + $0x8] sm:$0xff]
          %v2224 = vld [vmem:[#allocation3 + $0x10] sm:$0xff]
          %v2225 = vld [vmem:[#allocation3 + $0x18] sm:$0xff]
          %v2226 = vld [vmem:[#allocation3 + $0x20] sm:$0xff]
          %v2227 = vld [vmem:[#allocation3 + $0x28] sm:$0xff]
          %v2228 = vld [vmem:[#allocation3 + $0x30] sm:$0xff]
          %v2229 = vld [vmem:[#allocation3 + $0x38] sm:$0xff]
          %v2230 = vld [vmem:[#allocation3 + $0x40] sm:$0xff]
          %v2231 = vld [vmem:[#allocation3 + $0x48] sm:$0xff]
          %v2232 = vld [vmem:[#allocation3 + $0x50] sm:$0xff]
          %v2233 = vld [vmem:[#allocation3 + $0x58] sm:$0xff]
          %v2234 = vld [vmem:[#allocation3 + $0x60] sm:$0xff]
          %v2235 = vld [vmem:[#allocation3 + $0x68] sm:$0xff]
          %v2236 = vld [vmem:[#allocation3 + $0x70] sm:$0xff]
          %v2237 = vld [vmem:[#allocation3 + $0x78] sm:$0xff]
          %v2238 = vld [vmem:[#allocation3 + $0x80] sm:$0xff]
          %v2239 = vld [vmem:[#allocation3 + $0x88] sm:$0xff]
          %v2240 = vld [vmem:[#allocation3 + $0x90] sm:$0xff]
          %v2241 = vld [vmem:[#allocation3 + $0x98] sm:$0xff]
          %v2242 = vld [vmem:[#allocation3 + $0xa0] sm:$0xff]
          %v2243 = vld [vmem:[#allocation3 + $0xa8] sm:$0xff]
          %v2244 = vld [vmem:[#allocation3 + $0xb0] sm:$0xff]
          %v2245 = vld [vmem:[#allocation3 + $0xb8] sm:$0xff]
          %v2246 = vld [vmem:[#allocation3 + $0xc0] sm:$0xff]
          %v2247 = vld [vmem:[#allocation3 + $0xc8] sm:$0xff]
          %v2248 = vld [vmem:[#allocation3 + $0xd0] sm:$0xff]
          %v2249 = vld [vmem:[#allocation3 + $0xd8] sm:$0xff]
          %v2250 = vld [vmem:[#allocation3 + $0xe0] sm:$0xff]
          %v2251 = vld [vmem:[#allocation3 + $0xe8] sm:$0xff]
          %v2252 = vld [vmem:[#allocation3 + $0xf0] sm:$0xff]
          %v2253 = vld [vmem:[#allocation3 + $0xf8] sm:$0xff]
          %v2254 = vld [vmem:[%s6] sm:$0x1]
          %v2256 = vlaneseq
          %v2257 = vshrl.u32 %v2256, 7
          %v2258 = vsub.s32 0, %v2257
          %v2259 = vrot.slane %v2254, %v2258
          %v2261 = vadd.f32 %v2222, %v2259
          %v2262 = vadd.f32 %v2223, %v2259
          %v2263 = vadd.f32 %v2224, %v2259
          %v2264 = vadd.f32 %v2225, %v2259
          %v2265 = vadd.f32 %v2226, %v2259
          %v2266 = vadd.f32 %v2227, %v2259
          %v2267 = vadd.f32 %v2228, %v2259
          %v2268 = vadd.f32 %v2229, %v2259
          %v2269 = vadd.f32 %v2230, %v2259
          %v2270 = vadd.f32 %v2231, %v2259
          %v2271 = vadd.f32 %v2232, %v2259
          %v2272 = vadd.f32 %v2233, %v2259
          %v2273 = vadd.f32 %v2234, %v2259
          %v2274 = vadd.f32 %v2235, %v2259
          %v2275 = vadd.f32 %v2236, %v2259
          %v2276 = vadd.f32 %v2237, %v2259
          %v2277 = vadd.f32 %v2238, %v2259
          %v2278 = vadd.f32 %v2239, %v2259
          %v2279 = vadd.f32 %v2240, %v2259
          %v2280 = vadd.f32 %v2241, %v2259
          %v2281 = vadd.f32 %v2242, %v2259
          %v2282 = vadd.f32 %v2243, %v2259
          %v2283 = vadd.f32 %v2244, %v2259
          %v2284 = vadd.f32 %v2245, %v2259
          %v2285 = vadd.f32 %v2246, %v2259
          %v2286 = vadd.f32 %v2247, %v2259
          %v2287 = vadd.f32 %v2248, %v2259
          %v2288 = vadd.f32 %v2249, %v2259
          %v2289 = vadd.f32 %v2250, %v2259
          %v2290 = vadd.f32 %v2251, %v2259
          %v2291 = vadd.f32 %v2252, %v2259
          %v2292 = vadd.f32 %v2253, %v2259
          %2293 = vst [vmem:[%s367] sm:$0xff] %v2261
          %2294 = vst [vmem:[%s367 + $0x8] sm:$0xff] %v2262
          %2295 = vst [vmem:[%s367 + $0x10] sm:$0xff] %v2263
          %2296 = vst [vmem:[%s367 + $0x18] sm:$0xff] %v2264
          %2297 = vst [vmem:[%s367 + $0x20] sm:$0xff] %v2265
          %2298 = vst [vmem:[%s367 + $0x28] sm:$0xff] %v2266
          %2299 = vst [vmem:[%s367 + $0x30] sm:$0xff] %v2267
          %2300 = vst [vmem:[%s367 + $0x38] sm:$0xff] %v2268
          %2301 = vst [vmem:[%s367 + $0x40] sm:$0xff] %v2269
          %2302 = vst [vmem:[%s367 + $0x48] sm:$0xff] %v2270
          %2303 = vst [vmem:[%s367 + $0x50] sm:$0xff] %v2271
          %2304 = vst [vmem:[%s367 + $0x58] sm:$0xff] %v2272
          %2305 = vst [vmem:[%s367 + $0x60] sm:$0xff] %v2273
          %2306 = vst [vmem:[%s367 + $0x68] sm:$0xff] %v2274
          %2307 = vst [vmem:[%s367 + $0x70] sm:$0xff] %v2275
          %2308 = vst [vmem:[%s367 + $0x78] sm:$0xff] %v2276
          %2309 = vst [vmem:[%s367 + $0x80] sm:$0xff] %v2277
          %2310 = vst [vmem:[%s367 + $0x88] sm:$0xff] %v2278
          %2311 = vst [vmem:[%s367 + $0x90] sm:$0xff] %v2279
          %2312 = vst [vmem:[%s367 + $0x98] sm:$0xff] %v2280
          %2313 = vst [vmem:[%s367 + $0xa0] sm:$0xff] %v2281
          %2314 = vst [vmem:[%s367 + $0xa8] sm:$0xff] %v2282
          %2315 = vst [vmem:[%s367 + $0xb0] sm:$0xff] %v2283
          %2316 = vst [vmem:[%s367 + $0xb8] sm:$0xff] %v2284
          %2317 = vst [vmem:[%s367 + $0xc0] sm:$0xff] %v2285
          %2318 = vst [vmem:[%s367 + $0xc8] sm:$0xff] %v2286
          %2319 = vst [vmem:[%s367 + $0xd0] sm:$0xff] %v2287
          %2320 = vst [vmem:[%s367 + $0xd8] sm:$0xff] %v2288
          %2321 = vst [vmem:[%s367 + $0xe0] sm:$0xff] %v2289
          %2322 = vst [vmem:[%s367 + $0xe8] sm:$0xff] %v2290
          %2323 = vst [vmem:[%s367 + $0xf0] sm:$0xff] %v2291
          %2324 = vst [vmem:[%s367 + $0xf8] sm:$0xff] %v2292
        $region68: #{tpu_custom_call.1} parent=47 // pred_fallthru
          _
        %s2325 = sand.u32 %s212, 1
        %s2326 = scalar_lea.sflag [#allocation6], %s2325
        %s2327 = sand.u32 %s212, 1
        %s2328 = smul.addr %s2327, 256
        %s2329 = scalar_lea.vmem [#allocation10], %s2328
        // Predicated region
        $region69: #{tpu_custom_call.1} parent=47 // pred_check
          %p2330 = pneg %p222
        $region70: #{tpu_custom_call.1} parent=47 // pred_check_branch
          %2332 = sbr.rel (%p2330) target = $region72
        $region71: #{tpu_custom_call.1} parent=47 // pred_region
          %s2333 = smul.u32 32, %s29
          %s2335 = ssub.s32 4096, 4096
          %2336 = vsyncadd %s2326, %s2335
          %s2337 = smul.addr %s2333, 128
          %s2338 = scalar_lea.hbm %s7, %s2337
          %s2339 = sshll.u32 %s2329, 4
          %s2340 = int_to_ptr.vmem [resolvable:$true] %s2339
          %2345 = dma.vmem_to_hbm [thread:$0]  %s2340, 4096, %s2338, %s2326, 128, 128, 8
        $region72: #{tpu_custom_call.1} parent=47 // pred_fallthru
          _
      $region48: #{tpu_custom_call.1} parent=5 // pred_fallthru
        _
      %p2346 = scmp.le.s32.totalorder 2, %s20
      // Predicated region
      $region73: #{tpu_custom_call.1} parent=5 // pred_check
        %p2347 = pneg %p2346
      $region74: #{tpu_custom_call.1} parent=5 // pred_check_branch
        %2349 = sbr.rel (%p2347) target = $region76
      $region75: #{tpu_custom_call.1} parent=5 // pred_region
        %s2350 = ssub.s32 %s20, 2
        // Predicated region
        $region77: #{tpu_custom_call.1} parent=75 // pred_check
          %p2351 = pneg %p228
        $region78: #{tpu_custom_call.1} parent=75 // pred_check_branch
          %2353 = sbr.rel (%p2351) target = $region80
        $region79: #{tpu_custom_call.1} parent=75 // pred_region
          %s2354 = sand.u32 %s213, 1
          %s2355 = scalar_lea.sflag [#allocation6], %s2354
          %s2356 = sand.u32 %s213, 1
          %s2357 = smul.addr %s2356, 256
          %s2358 = scalar_lea.vmem [#allocation10], %s2357
          %2359 = dma.done %s2355, 4096
        $region80: #{tpu_custom_call.1} parent=75 // pred_fallthru
          _
      $region76: #{tpu_custom_call.1} parent=5 // pred_fallthru
        _
    $region6: #{tpu_custom_call.1} parent=1 // loop_footer
      %s24 = sadd.s32 1, %s20
    $region7: #{tpu_custom_call.1} parent=1 // loop_footer_branch
      %19 = sbr.rel target = $region3
    $region8: #{tpu_custom_call.1} parent=1 // loop_exit
      _
    %2360 = vsyncpa [#allocation5], 1
    %s2361 = scalar_lea.sflag [#allocation5], 1
    %2362 = vsyncpa %s2361, 1
    %2363 = vsyncpa [#allocation8], 1
    %2364 = vsyncpa [#allocation6], 1
    %s2365 = scalar_lea.sflag [#allocation6], 1
    %2366 = vsyncpa %s2365, 1

</llo_original>
